<compile_context>
chip_gen: v5e
topology: v5e:2x2
jax: 0.10.0
libtpu: 0.0.40
codegen_flags: <defaults>
</compile_context>

<pallas_src>
import math

import jax
import jax.numpy as jnp
from jax import lax
from jax.experimental import pallas as pl
from jax.experimental.pallas import tpu as pltpu


# ---------------------------------------------------------------------------
# Kernel
# ---------------------------------------------------------------------------

def _make_kernel(out_hd, in_hd, tl, tk):
    """Kernel closure over static shape parameters.

    Refs per grid step (b, head, li, ki):
      h_ref : (TL, in_hd)              one (batch, head, l-tile); constant over ki
      w_ref : (out_hd, in_hd, in_hd)   one head's weights; constant over li/ki
      vt_ref: (in_hd, TK)              one (batch, head, k-tile), pre-transposed
      o_ref : (out_hd, TL, TK)         lane-dense output block
      hw_ref: (out_hd*TL, in_hd)       VMEM scratch caching hw = h @ W across ki
    """

    def kernel(h_ref, w_ref, vt_ref, o_ref, hw_ref):
        # ---- first contraction: cached across the innermost (ki) axis -------
        # hw[d*TL + l, y] = sum_x h[l, x] * W[d, x, y]
        # Filled per-d with sublane-aligned stores so the scratch is already in
        # the (out_hd*TL, in_hd) layout the fused second matmul needs.  This
        # runs once per li tile and amortizes over all Lp/TK inner steps.
        @pl.when(pl.program_id(3) == 0)
        def _():
            h_blk = h_ref[...]
            if out_hd <= 16:
                # small static unroll (static offsets, no trace bloat)
                for d in range(out_hd):
                    hw_ref[pl.ds(d * tl, tl), :] = jnp.dot(
                        h_blk, w_ref[d], preferred_element_type=hw_ref.dtype)
            else:
                # avoid code-size bloat for large out_hd
                def body(d, carry):
                    off = pl.multiple_of(d * tl, tl)
                    hw_ref[pl.ds(off, tl), :] = jnp.dot(
                        h_blk, w_ref[d], preferred_element_type=hw_ref.dtype)
                    return carry
                lax.fori_loop(0, out_hd, body, 0)

        # ---- second contraction: ONE fused MXU matmul per (li, ki) ----------
        # (out_hd*TL, in_hd) @ (in_hd, TK) -> (out_hd*TL, TK), f32 accumulate.
        out = jnp.dot(hw_ref[...], vt_ref[...], preferred_element_type=jnp.float32)
        o_ref[...] = out.reshape(out_hd, tl, tk).astype(o_ref.dtype)

    return kernel


# ---------------------------------------------------------------------------
# Tiling / VMEM planning
# ---------------------------------------------------------------------------

def _round_up(x, m):
    return (x + m - 1) // m * m


def _padded_bytes(shape, itemsize):
    """VMEM footprint of a buffer, accounting for (sublane, lane) tiling pads."""
    s = list(shape)
    s[-1] = _round_up(s[-1], 128)
    if len(s) >= 2:
        sub = 8 * max(1, 4 // itemsize)      # 8 f32 / 16 bf16 / 32 int8 sublanes
        s[-2] = _round_up(s[-2], sub)
    n = 1
    for d in s:
        n *= d
    return n * itemsize


def _vmem_caps():
    """(plan_budget_bytes, vmem_limit_bytes) from the chip's physical VMEM."""
    cap = 64 << 20                            # conservative default (v7x physical)
    try:
        cap = int(getattr(pltpu.get_tpu_info(), "vmem_capacity_bytes", cap))
    except Exception:
        pass
    # Our explicit buffers fit in ~55% of physical VMEM; give the compiler a
    # limit at 75% so it keeps headroom for its own scratch.
    return int(cap * 0.55), int(cap * 0.75)


def _tile_candidates(lp, cap):
    """Multiples of 128 that divide lp, <= cap, descending (lp is a 128-multiple)."""
    t = min(lp, cap)
    t -= t % 128
    out = []
    while t >= 128:
        if lp % t == 0:
            out.append(t)
        t -= 128
    return out or [min(lp, 128)]


def _plan_tiles(lp, in_hd, out_hd, in_isz, acc_isz, budget):
    """Pick (TL, TK) accounting for every resident VMEM buffer."""

    def plan_bytes(tl, tk):
        b = 2 * _padded_bytes((tl, in_hd), in_isz)                  # h  (dbl-buf)
        b += 2 * _padded_bytes((in_hd, tk), in_isz)                 # vT (dbl-buf)
        b += 2 * _padded_bytes((out_hd, in_hd, in_hd), in_isz)      # W  (dbl-buf)
        b += _padded_bytes((out_hd * tl, in_hd), acc_isz)           # hw scratch
        b += _padded_bytes((out_hd * tl, tk), 4)                    # f32 dot result
        b += 2 * _padded_bytes((out_hd, tl, tk), in_isz)            # out (dbl-buf)
        return b

    tk_cands = _tile_candidates(lp, 512)
    tl_cands = _tile_candidates(lp, 512) + [t for t in (64, 32, 16, 8) if lp % t == 0]
    for tk in tk_cands:        # keep the lane (store) dim as wide as possible
        for tl in tl_cands:    # shrink TL before TK when VMEM is tight
            if plan_bytes(tl, tk) <= budget:
                return tl, tk
    return tl_cands[-1], tk_cands[-1]


# ---------------------------------------------------------------------------
# Wrapper
# ---------------------------------------------------------------------------

def multi_head_biaffine(h, v, W, out_dim):
    """h, v: (bsz, L, dim); W: (n_head, out_hd, in_hd, in_hd).
    Returns (bsz, out_dim, L, L), matching the PyTorch module."""
    bsz, L, dim = h.shape
    n_head, out_hd, in_hd, _ = W.shape
    assert dim == n_head * in_hd and out_dim == n_head * out_hd

    # Pad L to a multiple of 128: lane-dense, unmasked output stores and a
    # well-conditioned tiling for any L (padded rows/cols are sliced off).
    lp = _round_up(max(L, 128), 128)
    if lp != L:
        pad = ((0, 0), (0, lp - L), (0, 0))
        h = jnp.pad(h, pad)
        v = jnp.pad(v, pad)

    # Layout glue (cheap relative to the L^2 * out_dim output writes):
    #   h -> head-major     (bsz, n_head, Lp, in_hd)
    #   v -> head-major, T  (bsz, n_head, in_hd, Lp)   lane-dense, no in-kernel T
    #   W stays (n_head, out_hd, in_hd, in_hd)
    h_heads = jnp.transpose(h.reshape(bsz, lp, n_head, in_hd), (0, 2, 1, 3))
    vt_heads = jnp.transpose(v.reshape(bsz, lp, n_head, in_hd), (0, 2, 3, 1))

    in_isz = jnp.dtype(h.dtype).itemsize
    budget, vmem_limit = _vmem_caps()
    tl, tk = _plan_tiles(lp, in_hd, out_hd, in_isz, in_isz, budget)
    grid = (bsz, n_head, lp // tl, lp // tk)

    # Advisory cost estimate: 2nd contraction dominates FLOPs, output dominates bytes.
    flops = 2 * bsz * n_head * out_hd * in_hd * lp * (lp + in_hd)
    bytes_out = bsz * n_head * out_hd * lp * lp * in_isz
    bytes_in = (2 * bsz * lp * dim + n_head * out_hd * in_hd * in_hd) * in_isz
    cost = pl.CostEstimate(flops=int(flops), transcendentals=0,
                           bytes_accessed=int(bytes_out + bytes_in))

    out = pl.pallas_call(
        _make_kernel(out_hd, in_hd, tl, tk),
        out_shape=jax.ShapeDtypeStruct((bsz, n_head, out_hd, lp, lp), h.dtype),
        grid_spec=pltpu.PrefetchScalarGridSpec(
            num_scalar_prefetch=0,
            grid=grid,
            in_specs=[
                # (bsz, n_head, Lp, in_hd) -> (TL, in_hd); constant across ki.
                pl.BlockSpec((None, None, tl, in_hd),
                             lambda b, hh, li, ki: (b, hh, li, 0)),
                # (n_head, out_hd, in_hd, in_hd) -> one head's weight slab;
                # resident across all li/ki tiles of that head.
                pl.BlockSpec((None, out_hd, in_hd, in_hd),
                             lambda b, hh, li, ki: (hh, 0, 0, 0)),
                # (bsz, n_head, in_hd, Lp) -> (in_hd, TK), lane-dense.
                pl.BlockSpec((None, None, in_hd, tk),
                             lambda b, hh, li, ki: (b, hh, 0, ki)),
            ],
            # (bsz, n_head, out_hd, Lp, Lp) -> (out_hd, TL, TK): every grid step
            # writes a distinct lane-dense block -> fully pipelined writeback.
            out_specs=pl.BlockSpec((None, None, out_hd, tl, tk),
                                   lambda b, hh, li, ki: (b, hh, 0, li, ki)),
            # hw = h @ W cached across ki (computed under pl.when(ki == 0)).
            scratch_shapes=[pltpu.VMEM((out_hd * tl, in_hd), h.dtype)],
        ),
        compiler_params=pltpu.CompilerParams(
            # ki must be "arbitrary": the hw scratch is carried across ki, so
            # megacore may only shard the b / head / li axes.
            dimension_semantics=("parallel", "parallel", "parallel", "arbitrary"),
            vmem_limit_bytes=vmem_limit,
        ),
        cost_estimate=cost,
    )(h_heads, W, vt_heads)

    # (bsz, n_head, out_hd, Lp, Lp) -> (bsz, out_dim, L, L)
    return out.reshape(bsz, out_dim, lp, lp)[:, :, :L, :L]


# ---------------------------------------------------------------------------
# Reference + test
# ---------------------------------------------------------------------------

def _reference(h, v, W, out_dim):
    bsz, L, dim = h.shape
    n_head, out_hd, in_hd, _ = W.shape
    hh = h.reshape(bsz, L, n_head, in_hd)
    vv = v.reshape(bsz, L, n_head, in_hd)
    w = jnp.einsum("blhx,hdxy,bkhy->bhdlk", hh, W, vv)
    return w.reshape(bsz, out_dim, L, L)


def _xavier_normal(key, shape):
    # torch xavier_normal_ for ndim>2: fan_in = shape[1]*prod(shape[2:]),
    # fan_out = shape[0]*prod(shape[2:])
    rec = 1
    for s in shape[2:]:
        rec *= s
    fan_in = shape[1] * rec
    fan_out = shape[0] * rec
    std = math.sqrt(2.0 / (fan_in + fan_out))
    return jax.random.normal(key, shape, dtype=jnp.float32) * std


if __name__ == "__main__":
    key = jax.random.PRNGKey(0)
    k_h, k_v, k_w = jax.random.split(key, 3)

    bsz, L, dim, n_head = 2, 8, 32, 4
    out_dim = dim                      # default `out=None` -> out = dim
    in_hd = dim // n_head
    out_hd = out_dim // n_head

    h = jax.random.normal(k_h, (bsz, L, dim), dtype=jnp.float32)
    v = jax.random.normal(k_v, (bsz, L, dim), dtype=jnp.float32)
    W = _xavier_normal(k_w, (n_head, out_hd, in_hd, in_hd))

    out = multi_head_biaffine(h, v, W, out_dim)
    out = jax.block_until_ready(out)

    ref = _reference(h, v, W, out_dim)
    assert out.shape == (bsz, out_dim, L, L)
    assert jnp.allclose(out, ref, atol=1e-4, rtol=1e-4), \
        float(jnp.max(jnp.abs(out - ref)))

    print("KERNEL_OK")
</pallas_src>

<mosaic_0001>
module attributes {stable_mosaic.version = 11 : i64} {
  func.func @kernel(%arg0: i32, %arg1: i32, %arg2: i32, %arg3: i32, %arg4: memref<1x1x128x8xf32, #tpu.memory_space<vmem>>, %arg5: memref<1x8x8x8xf32, #tpu.memory_space<vmem>>, %arg6: memref<1x1x8x128xf32, #tpu.memory_space<vmem>>, %arg7: memref<1x1x8x128x128xf32, #tpu.memory_space<vmem>>, %arg8: memref<1024x8xf32, #tpu.memory_space<vmem>>) attributes {dimension_semantics = [#tpu.dimension_semantics<parallel>, #tpu.dimension_semantics<parallel>, #tpu.dimension_semantics<parallel>, #tpu.dimension_semantics<arbitrary>], iteration_bounds = array<i64: 2, 4, 1, 1>, scalar_prefetch = 0 : i64, scratch_operands = 1 : i64, tpu.core_type = #tpu.core_type<tc>, window_params = [{transform_indices = @transform_0, window_bounds = array<i64: 1, 1, 128, 8>}, {transform_indices = @transform_1, window_bounds = array<i64: 1, 8, 8, 8>}, {transform_indices = @transform_2, window_bounds = array<i64: 1, 1, 8, 128>}, {transform_indices = @transform_3, window_bounds = array<i64: 1, 1, 8, 128, 128>}]} {
    %c0_i32 = arith.constant 0 : i32
    %0 = arith.cmpi eq, %arg3, %c0_i32 : i32
    %1 = arith.extui %0 : i1 to i32
    %c0_i32_0 = arith.constant 0 : i32
    %2 = arith.cmpi ne, %1, %c0_i32_0 : i32
    scf.if %2 {
      %c0_11 = arith.constant 0 : index
      %c0_12 = arith.constant 0 : index
      %c0_13 = arith.constant 0 : index
      %c0_14 = arith.constant 0 : index
      %11 = vector.load %arg4[%c0_11, %c0_12, %c0_13, %c0_14] : memref<1x1x128x8xf32, #tpu.memory_space<vmem>>, vector<1x1x128x8xf32>
      %12 = vector.shape_cast %11 : vector<1x1x128x8xf32> to vector<128x8xf32>
      %c0_15 = arith.constant 0 : index
      %c0_16 = arith.constant 0 : index
      %c0_17 = arith.constant 0 : index
      %c0_18 = arith.constant 0 : index
      %13 = vector.load %arg5[%c0_15, %c0_16, %c0_17, %c0_18] : memref<1x8x8x8xf32, #tpu.memory_space<vmem>>, vector<1x1x8x8xf32>
      %14 = vector.shape_cast %13 : vector<1x1x8x8xf32> to vector<8x8xf32>
      %cst_19 = arith.constant dense<0.000000e+00> : vector<128x8xf32>
      %15 = tpu.matmul %12, %14, %cst_19 {dimension_numbers = #tpu.dot_dimension_numbers<[1], [0], [0], [1], [0, 0, 1, 1], [], []>} : vector<128x8xf32>, vector<8x8xf32>, vector<128x8xf32> -> vector<128x8xf32>
      %c0_20 = arith.constant 0 : index
      %c0_21 = arith.constant 0 : index
      %16 = vector.load %arg8[%c0_20, %c0_21] : memref<1024x8xf32, #tpu.memory_space<vmem>>, vector<128x8xf32>
      tpu.vector_store %arg8[%c0_20, %c0_21], %15 {strides = array<i32>} : memref<1024x8xf32, #tpu.memory_space<vmem>>, vector<128x8xf32>,
      %c0_22 = arith.constant 0 : index
      %c1 = arith.constant 1 : index
      %c0_23 = arith.constant 0 : index
      %c0_24 = arith.constant 0 : index
      %17 = vector.load %arg5[%c0_22, %c1, %c0_23, %c0_24] : memref<1x8x8x8xf32, #tpu.memory_space<vmem>>, vector<1x1x8x8xf32>
      %18 = vector.shape_cast %17 : vector<1x1x8x8xf32> to vector<8x8xf32>
      %cst_25 = arith.constant dense<0.000000e+00> : vector<128x8xf32>
      %19 = tpu.matmul %12, %18, %cst_25 {dimension_numbers = #tpu.dot_dimension_numbers<[1], [0], [0], [1], [0, 0, 1, 1], [], []>} : vector<128x8xf32>, vector<8x8xf32>, vector<128x8xf32> -> vector<128x8xf32>
      %c128 = arith.constant 128 : index
      %c0_26 = arith.constant 0 : index
      %20 = vector.load %arg8[%c128, %c0_26] : memref<1024x8xf32, #tpu.memory_space<vmem>>, vector<128x8xf32>
      tpu.vector_store %arg8[%c128, %c0_26], %19 {strides = array<i32>} : memref<1024x8xf32, #tpu.memory_space<vmem>>, vector<128x8xf32>,
      %c0_27 = arith.constant 0 : index
      %c2 = arith.constant 2 : index
      %c0_28 = arith.constant 0 : index
      %c0_29 = arith.constant 0 : index
      %21 = vector.load %arg5[%c0_27, %c2, %c0_28, %c0_29] : memref<1x8x8x8xf32, #tpu.memory_space<vmem>>, vector<1x1x8x8xf32>
      %22 = vector.shape_cast %21 : vector<1x1x8x8xf32> to vector<8x8xf32>
      %cst_30 = arith.constant dense<0.000000e+00> : vector<128x8xf32>
      %23 = tpu.matmul %12, %22, %cst_30 {dimension_numbers = #tpu.dot_dimension_numbers<[1], [0], [0], [1], [0, 0, 1, 1], [], []>} : vector<128x8xf32>, vector<8x8xf32>, vector<128x8xf32> -> vector<128x8xf32>
      %c256 = arith.constant 256 : index
      %c0_31 = arith.constant 0 : index
      %24 = vector.load %arg8[%c256, %c0_31] : memref<1024x8xf32, #tpu.memory_space<vmem>>, vector<128x8xf32>
      tpu.vector_store %arg8[%c256, %c0_31], %23 {strides = array<i32>} : memref<1024x8xf32, #tpu.memory_space<vmem>>, vector<128x8xf32>,
      %c0_32 = arith.constant 0 : index
      %c3 = arith.constant 3 : index
      %c0_33 = arith.constant 0 : index
      %c0_34 = arith.constant 0 : index
      %25 = vector.load %arg5[%c0_32, %c3, %c0_33, %c0_34] : memref<1x8x8x8xf32, #tpu.memory_space<vmem>>, vector<1x1x8x8xf32>
      %26 = vector.shape_cast %25 : vector<1x1x8x8xf32> to vector<8x8xf32>
      %cst_35 = arith.constant dense<0.000000e+00> : vector<128x8xf32>
      %27 = tpu.matmul %12, %26, %cst_35 {dimension_numbers = #tpu.dot_dimension_numbers<[1], [0], [0], [1], [0, 0, 1, 1], [], []>} : vector<128x8xf32>, vector<8x8xf32>, vector<128x8xf32> -> vector<128x8xf32>
      %c384 = arith.constant 384 : index
      %c0_36 = arith.constant 0 : index
      %28 = vector.load %arg8[%c384, %c0_36] : memref<1024x8xf32, #tpu.memory_space<vmem>>, vector<128x8xf32>
      tpu.vector_store %arg8[%c384, %c0_36], %27 {strides = array<i32>} : memref<1024x8xf32, #tpu.memory_space<vmem>>, vector<128x8xf32>,
      %c0_37 = arith.constant 0 : index
      %c4 = arith.constant 4 : index
      %c0_38 = arith.constant 0 : index
      %c0_39 = arith.constant 0 : index
      %29 = vector.load %arg5[%c0_37, %c4, %c0_38, %c0_39] : memref<1x8x8x8xf32, #tpu.memory_space<vmem>>, vector<1x1x8x8xf32>
      %30 = vector.shape_cast %29 : vector<1x1x8x8xf32> to vector<8x8xf32>
      %cst_40 = arith.constant dense<0.000000e+00> : vector<128x8xf32>
      %31 = tpu.matmul %12, %30, %cst_40 {dimension_numbers = #tpu.dot_dimension_numbers<[1], [0], [0], [1], [0, 0, 1, 1], [], []>} : vector<128x8xf32>, vector<8x8xf32>, vector<128x8xf32> -> vector<128x8xf32>
      %c512 = arith.constant 512 : index
      %c0_41 = arith.constant 0 : index
      %32 = vector.load %arg8[%c512, %c0_41] : memref<1024x8xf32, #tpu.memory_space<vmem>>, vector<128x8xf32>
      tpu.vector_store %arg8[%c512, %c0_41], %31 {strides = array<i32>} : memref<1024x8xf32, #tpu.memory_space<vmem>>, vector<128x8xf32>,
      %c0_42 = arith.constant 0 : index
      %c5 = arith.constant 5 : index
      %c0_43 = arith.constant 0 : index
      %c0_44 = arith.constant 0 : index
      %33 = vector.load %arg5[%c0_42, %c5, %c0_43, %c0_44] : memref<1x8x8x8xf32, #tpu.memory_space<vmem>>, vector<1x1x8x8xf32>
      %34 = vector.shape_cast %33 : vector<1x1x8x8xf32> to vector<8x8xf32>
      %cst_45 = arith.constant dense<0.000000e+00> : vector<128x8xf32>
      %35 = tpu.matmul %12, %34, %cst_45 {dimension_numbers = #tpu.dot_dimension_numbers<[1], [0], [0], [1], [0, 0, 1, 1], [], []>} : vector<128x8xf32>, vector<8x8xf32>, vector<128x8xf32> -> vector<128x8xf32>
      %c640 = arith.constant 640 : index
      %c0_46 = arith.constant 0 : index
      %36 = vector.load %arg8[%c640, %c0_46] : memref<1024x8xf32, #tpu.memory_space<vmem>>, vector<128x8xf32>
      tpu.vector_store %arg8[%c640, %c0_46], %35 {strides = array<i32>} : memref<1024x8xf32, #tpu.memory_space<vmem>>, vector<128x8xf32>,
      %c0_47 = arith.constant 0 : index
      %c6 = arith.constant 6 : index
      %c0_48 = arith.constant 0 : index
      %c0_49 = arith.constant 0 : index
      %37 = vector.load %arg5[%c0_47, %c6, %c0_48, %c0_49] : memref<1x8x8x8xf32, #tpu.memory_space<vmem>>, vector<1x1x8x8xf32>
      %38 = vector.shape_cast %37 : vector<1x1x8x8xf32> to vector<8x8xf32>
      %cst_50 = arith.constant dense<0.000000e+00> : vector<128x8xf32>
      %39 = tpu.matmul %12, %38, %cst_50 {dimension_numbers = #tpu.dot_dimension_numbers<[1], [0], [0], [1], [0, 0, 1, 1], [], []>} : vector<128x8xf32>, vector<8x8xf32>, vector<128x8xf32> -> vector<128x8xf32>
      %c768 = arith.constant 768 : index
      %c0_51 = arith.constant 0 : index
      %40 = vector.load %arg8[%c768, %c0_51] : memref<1024x8xf32, #tpu.memory_space<vmem>>, vector<128x8xf32>
      tpu.vector_store %arg8[%c768, %c0_51], %39 {strides = array<i32>} : memref<1024x8xf32, #tpu.memory_space<vmem>>, vector<128x8xf32>,
      %c0_52 = arith.constant 0 : index
      %c7 = arith.constant 7 : index
      %c0_53 = arith.constant 0 : index
      %c0_54 = arith.constant 0 : index
      %41 = vector.load %arg5[%c0_52, %c7, %c0_53, %c0_54] : memref<1x8x8x8xf32, #tpu.memory_space<vmem>>, vector<1x1x8x8xf32>
      %42 = vector.shape_cast %41 : vector<1x1x8x8xf32> to vector<8x8xf32>
      %cst_55 = arith.constant dense<0.000000e+00> : vector<128x8xf32>
      %43 = tpu.matmul %12, %42, %cst_55 {dimension_numbers = #tpu.dot_dimension_numbers<[1], [0], [0], [1], [0, 0, 1, 1], [], []>} : vector<128x8xf32>, vector<8x8xf32>, vector<128x8xf32> -> vector<128x8xf32>
      %c896 = arith.constant 896 : index
      %c0_56 = arith.constant 0 : index
      %44 = vector.load %arg8[%c896, %c0_56] : memref<1024x8xf32, #tpu.memory_space<vmem>>, vector<128x8xf32>
      tpu.vector_store %arg8[%c896, %c0_56], %43 {strides = array<i32>} : memref<1024x8xf32, #tpu.memory_space<vmem>>, vector<128x8xf32>,
    } else {
    }
    %c0 = arith.constant 0 : index
    %c0_1 = arith.constant 0 : index
    %3 = vector.load %arg8[%c0, %c0_1] : memref<1024x8xf32, #tpu.memory_space<vmem>>, vector<1024x8xf32>
    %c0_2 = arith.constant 0 : index
    %c0_3 = arith.constant 0 : index
    %c0_4 = arith.constant 0 : index
    %c0_5 = arith.constant 0 : index
    %4 = vector.load %arg6[%c0_2, %c0_3, %c0_4, %c0_5] : memref<1x1x8x128xf32, #tpu.memory_space<vmem>>, vector<1x1x8x128xf32>
    %5 = vector.shape_cast %4 : vector<1x1x8x128xf32> to vector<8x128xf32>
    %cst = arith.constant dense<0.000000e+00> : vector<1024x128xf32>
    %6 = tpu.matmul %3, %5, %cst {dimension_numbers = #tpu.dot_dimension_numbers<[1], [0], [0], [1], [0, 0, 1, 1], [], []>} : vector<1024x8xf32>, vector<8x128xf32>, vector<1024x128xf32> -> vector<1024x128xf32>
    %7 = vector.shape_cast %6 : vector<1024x128xf32> to vector<8x128x128xf32>
    %c0_6 = arith.constant 0 : index
    %c0_7 = arith.constant 0 : index
    %c0_8 = arith.constant 0 : index
    %c0_9 = arith.constant 0 : index
    %c0_10 = arith.constant 0 : index
    %8 = vector.load %arg7[%c0_6, %c0_7, %c0_8, %c0_9, %c0_10] : memref<1x1x8x128x128xf32, #tpu.memory_space<vmem>>, vector<1x1x8x128x128xf32>
    %9 = vector.shape_cast %8 : vector<1x1x8x128x128xf32> to vector<8x128x128xf32>
    %10 = vector.shape_cast %7 : vector<8x128x128xf32> to vector<1x1x8x128x128xf32>
    tpu.vector_store %arg7[%c0_6, %c0_7, %c0_8, %c0_9, %c0_10], %10 {strides = array<i32>} : memref<1x1x8x128x128xf32, #tpu.memory_space<vmem>>, vector<1x1x8x128x128xf32>,
    return
  }
  func.func @transform_0(%arg0: i32, %arg1: i32, %arg2: i32, %arg3: i32) -> (i32, i32, i32, i32) {
    %c0_i32 = arith.constant 0 : i32
    %c0_i32_0 = arith.constant 0 : i32
    return %arg0, %arg1, %arg2, %c0_i32 : i32, i32, i32, i32
  }
  func.func @transform_1(%arg0: i32, %arg1: i32, %arg2: i32, %arg3: i32) -> (i32, i32, i32, i32) {
    %c0_i32 = arith.constant 0 : i32
    %c0_i32_0 = arith.constant 0 : i32
    %c0_i32_1 = arith.constant 0 : i32
    %c0_i32_2 = arith.constant 0 : i32
    return %arg1, %c0_i32, %c0_i32_0, %c0_i32_1 : i32, i32, i32, i32
  }
  func.func @transform_2(%arg0: i32, %arg1: i32, %arg2: i32, %arg3: i32) -> (i32, i32, i32, i32) {
    %c0_i32 = arith.constant 0 : i32
    %c0_i32_0 = arith.constant 0 : i32
    return %arg0, %arg1, %c0_i32, %arg3 : i32, i32, i32, i32
  }
  func.func @transform_3(%arg0: i32, %arg1: i32, %arg2: i32, %arg3: i32) -> (i32, i32, i32, i32, i32) {
    %c0_i32 = arith.constant 0 : i32
    %c0_i32_0 = arith.constant 0 : i32
    return %arg0, %arg1, %c0_i32, %arg2, %arg3 : i32, i32, i32, i32, i32
  }
}

</mosaic_0001>

<llo_original>
// kernel: tpu_custom_call.1
$region0: #{tpu_custom_call.1}
  #allocation0 [shape = 'u32[]', space=smem, size = 0x4, offset = 0x4, fixed_abs, tag = 'smem constant byte address 0x4 - core index']
  #allocation1 [shape = 'u32[72,128]{1,0:T(1,128)}', space=vmem, size = 0x9000, scoped, tag = 'internal scratch']
  #allocation2 [shape = 'f32[1024,8]{1,0:T(8,128)}', space=vmem, size = 0x80000, scoped, tag = 'scratch operand']
  %s0 = inlined_call_operand.vmem [shape: f32[2,4,128,8], index: 0, kind: input, shape index: {}]
  %s1 = inlined_call_operand.hbm [shape: f32[4,8,8,8], index: 1, kind: input, shape index: {}]
  %s2 = inlined_call_operand.hbm [shape: f32[2,4,8,128], index: 2, kind: input, shape index: {}]
  %s3 = inlined_call_operand.hbm [shape: f32[2,4,8,128,128], index: 3, kind: output, shape index: {}]
  %s4 = sld [smem:[#allocation0]]
  $region57: #{tpu_custom_call.1} parent=0
    _
  %s6 = ssub.s32 1, %s4
  %s7 = scalar_select 0, %s6, %s4
  $region1: #{tpu_custom_call.1} parent=0
    #allocation3 [shape = 'u8[65536]{0}', space=vmem, size = 0x10000, scoped, tag = 'input window, operand 1']
    #allocation4 [shape = 's32[2]{0}', space=sflag, size = 0x8, scoped, tag = 'scoped memory for tpu_custom_call.1']
    #allocation5 [shape = 's32[2]{0}', space=sflag, size = 0x8, scoped, tag = 'scoped memory for tpu_custom_call.1']
    #allocation6 [shape = 'u8[8192]{0}', space=vmem, size = 0x2000, scoped, tag = 'input window, operand 2']
    #allocation7 [shape = 's32[2]{0}', space=sflag, size = 0x8, scoped, tag = 'scoped memory for tpu_custom_call.1']
    #allocation8 [shape = 'u8[1048576]{0}', space=vmem, size = 0x100000, scoped, tag = 'output window, operand 0']
    %8 = vsyncpa [#allocation4], 0
    %s9 = scalar_lea.sflag [#allocation4], 1
    %10 = vsyncpa %s9, 0
    %11 = vsyncpa [#allocation7], 0
    %s12 = scalar_lea.sflag [#allocation7], 1
    %13 = vsyncpa %s12, 0
    %14 = vsyncpa [#allocation5], 0
    %s15 = scalar_lea.sflag [#allocation5], 1
    %16 = vsyncpa %s15, 0
    loop: start=0, step=1, limit=10
    $region2: #{tpu_custom_call.1} parent=1 // loop_pre_header
      _
    $region3: #{tpu_custom_call.1} parent=1 // loop_header
      %s18 = sphi 0, %s22
      %p19 = scmp.ge.s32.totalorder %s18, 10
      %s25 = sphi 0, %s51
      %s26 = sphi 0, %s47
      %s27 = sphi 0, %s43
      %s28 = sphi 0, %s39
      %s29 = sphi 0, %s25
      %s30 = sphi 0, %s26
      %s31 = sphi 0, %s27
      %s32 = sphi 0, %s28
      %s33 = sphi 0, %s29
      %s34 = sphi 0, %s30
      %s35 = sphi 0, %s31
      %s36 = sphi 0, %s32
      %s58 = sphi 0, %s60
      %s61 = sphi 0, %s58
      %s62 = sphi 0, %s61
      %s78 = sphi 0, %s62
      %s84 = sphi 0, %s86
      %s87 = sphi 0, %s84
      %s88 = sphi 0, %s87
      %s104 = sphi 0, %s88
      %s114 = sphi 0, %s116
      %s117 = sphi 0, %s114
      %s118 = sphi 0, %s117
      %s134 = sphi 0, %s118
      %s146 = sphi 0, %s148
      %s149 = sphi 0, %s146
      %s150 = sphi 0, %s149
      %s166 = sphi 0, %s150
    $region4: #{tpu_custom_call.1} parent=1 // loop_header_branch
      %21 = sbr.rel (%p19) target = $region8
    $region5: #{tpu_custom_call.1} parent=1 // loop_body
      %s23 = ssub.s32 %s18, 1
      %s24 = ssub.s32 %s18, 2
      %s37 = sadd.s32 1, %s28
      %p38 = scmp.ge.s32.totalorder %s37, 1
      %s39 = scalar_select %p38, 0, %s37
      %s40 = sadd.s32 1, %s27
      %s41 = scalar_select %p38, %s40, %s27
      %p42 = scmp.ge.s32.totalorder %s41, 1
      %s43 = scalar_select %p42, 0, %s41
      %s44 = sadd.s32 1, %s26
      %s45 = scalar_select %p42, %s44, %s26
      %p46 = scmp.ge.s32.totalorder %s45, 4
      %s47 = scalar_select %p46, 0, %s45
      %s48 = sadd.s32 1, %s25
      %s49 = scalar_select %p46, %s48, %s25
      %p50 = scmp.ge.s32.totalorder %s49, 2
      %s51 = scalar_select %p50, 0, %s49
      %s52 = ssub.s32 %s25, %s51
      %s53 = ssub.s32 %s26, %s47
      %s54 = sor.u32 %s52, %s53
      %s55 = ssub.s32 %s27, %s43
      %s56 = sor.u32 %s54, %s55
      %p57 = scmp.eq.s32.totalorder %s56, 0
      %s59 = sadd.s32 %s58, 1
      %s60 = scalar_select %p57, %s58, %s59
      %p63 = pneg %p57
      %p64 = scmp.eq.s32.totalorder %s18, 7
      %p65 = por %p63, %p64
      %p66 = scmp.ne.s32.totalorder %s58, %s61
      %p67 = scmp.eq.s32.totalorder %s18, 0
      %p68 = por %p66, %p67
      %p69 = scmp.ne.s32.totalorder %s58, %s61
      %p70 = scmp.eq.s32.totalorder %s23, 7
      %p71 = por %p69, %p70
      %p72 = scmp.ne.s32.totalorder %s61, %s62
      %p73 = scmp.eq.s32.totalorder %s23, 0
      %p74 = por %p72, %p73
      %p75 = scmp.ne.s32.totalorder %s61, %s62
      %p76 = scmp.eq.s32.totalorder %s24, 7
      %p77 = por %p75, %p76
      %p79 = scmp.ne.s32.totalorder %s62, %s78
      %p80 = scmp.eq.s32.totalorder %s24, 0
      %p81 = por %p79, %p80
      %s82 = ssub.s32 %s26, %s47
      %p83 = scmp.eq.s32.totalorder %s82, 0
      %s85 = sadd.s32 %s84, 1
      %s86 = scalar_select %p83, %s84, %s85
      %p89 = pneg %p83
      %p90 = scmp.eq.s32.totalorder %s18, 7
      %p91 = por %p89, %p90
      %p92 = scmp.ne.s32.totalorder %s84, %s87
      %p93 = scmp.eq.s32.totalorder %s18, 0
      %p94 = por %p92, %p93
      %p95 = scmp.ne.s32.totalorder %s84, %s87
      %p96 = scmp.eq.s32.totalorder %s23, 7
      %p97 = por %p95, %p96
      %p98 = scmp.ne.s32.totalorder %s87, %s88
      %p99 = scmp.eq.s32.totalorder %s23, 0
      %p100 = por %p98, %p99
      %p101 = scmp.ne.s32.totalorder %s87, %s88
      %p102 = scmp.eq.s32.totalorder %s24, 7
      %p103 = por %p101, %p102
      %p105 = scmp.ne.s32.totalorder %s88, %s104
      %p106 = scmp.eq.s32.totalorder %s24, 0
      %p107 = por %p105, %p106
      %s108 = ssub.s32 %s25, %s51
      %s109 = ssub.s32 %s26, %s47
      %s110 = sor.u32 %s108, %s109
      %s111 = ssub.s32 %s28, %s39
      %s112 = sor.u32 %s110, %s111
      %p113 = scmp.eq.s32.totalorder %s112, 0
      %s115 = sadd.s32 %s114, 1
      %s116 = scalar_select %p113, %s114, %s115
      %p119 = pneg %p113
      %p120 = scmp.eq.s32.totalorder %s18, 7
      %p121 = por %p119, %p120
      %p122 = scmp.ne.s32.totalorder %s114, %s117
      %p123 = scmp.eq.s32.totalorder %s18, 0
      %p124 = por %p122, %p123
      %p125 = scmp.ne.s32.totalorder %s114, %s117
      %p126 = scmp.eq.s32.totalorder %s23, 7
      %p127 = por %p125, %p126
      %p128 = scmp.ne.s32.totalorder %s117, %s118
      %p129 = scmp.eq.s32.totalorder %s23, 0
      %p130 = por %p128, %p129
      %p131 = scmp.ne.s32.totalorder %s117, %s118
      %p132 = scmp.eq.s32.totalorder %s24, 7
      %p133 = por %p131, %p132
      %p135 = scmp.ne.s32.totalorder %s118, %s134
      %p136 = scmp.eq.s32.totalorder %s24, 0
      %p137 = por %p135, %p136
      %s138 = ssub.s32 %s25, %s51
      %s139 = ssub.s32 %s26, %s47
      %s140 = sor.u32 %s138, %s139
      %s141 = ssub.s32 %s27, %s43
      %s142 = sor.u32 %s140, %s141
      %s143 = ssub.s32 %s28, %s39
      %s144 = sor.u32 %s142, %s143
      %p145 = scmp.eq.s32.totalorder %s144, 0
      %s147 = sadd.s32 %s146, 1
      %s148 = scalar_select %p145, %s146, %s147
      %p151 = pneg %p145
      %p152 = scmp.eq.s32.totalorder %s18, 7
      %p153 = por %p151, %p152
      %p154 = scmp.ne.s32.totalorder %s146, %s149
      %p155 = scmp.eq.s32.totalorder %s18, 0
      %p156 = por %p154, %p155
      %p157 = scmp.ne.s32.totalorder %s146, %s149
      %p158 = scmp.eq.s32.totalorder %s23, 7
      %p159 = por %p157, %p158
      %p160 = scmp.ne.s32.totalorder %s149, %s150
      %p161 = scmp.eq.s32.totalorder %s23, 0
      %p162 = por %p160, %p161
      %p163 = scmp.ne.s32.totalorder %s149, %s150
      %p164 = scmp.eq.s32.totalorder %s24, 7
      %p165 = por %p163, %p164
      %p167 = scmp.ne.s32.totalorder %s150, %s166
      %p168 = scmp.eq.s32.totalorder %s24, 0
      %p169 = por %p167, %p168
      %p170 = scmp.le.s32.totalorder 1, %s18
      %p171 = scmp.lt.s32.totalorder %s18, 9
      %p172 = pnand %p170, %p171
      %p173 = pneg %p172
      // Predicated region
      $region9: #{tpu_custom_call.1} parent=5 // pred_check
        _
      $region10: #{tpu_custom_call.1} parent=5 // pred_check_branch
        %175 = sbr.rel (%p172) target = $region12
      $region11: #{tpu_custom_call.1} parent=5 // pred_region
        %s176 = ssub.s32 %s18, 1
      $region12: #{tpu_custom_call.1} parent=5 // pred_fallthru
        _
      %p177 = scmp.lt.s32.totalorder %s18, 8
      // Predicated region
      $region13: #{tpu_custom_call.1} parent=5 // pred_check
        %p178 = pneg %p177
      $region14: #{tpu_custom_call.1} parent=5 // pred_check_branch
        %180 = sbr.rel (%p178) target = $region16
      $region15: #{tpu_custom_call.1} parent=5 // pred_region
        // Predicated region
        $region17: #{tpu_custom_call.1} parent=15 // pred_check
          %p181 = pneg %p68
        $region18: #{tpu_custom_call.1} parent=15 // pred_check_branch
          %183 = sbr.rel (%p181) target = $region20
        $region19: #{tpu_custom_call.1} parent=15 // pred_region
          %s184 = smul.u32 16, %s27
          %p185 = scmp.lt.s32.totalorder %s25, 1
          %s186 = scalar_select %p185, %s25, 1
          %p187 = scmp.lt.s32.totalorder %s26, 3
          %s188 = scalar_select %p187, %s26, 3
          %p189 = scmp.lt.s32.totalorder %s184, 15
          %s190 = scalar_select %p189, %s184, 15
          %s191 = smul.addr %s188, 16
          %s192 = sadd.s32 %s190, %s191
          %s193 = smul.addr %s186, 64
          %s194 = sadd.s32 %s192, %s193
          %s195 = smul.addr %s194, 8
          %s196 = scalar_lea.vmem %s0, %s195
          %s197 = smul.u32 16, %s27
        $region20: #{tpu_custom_call.1} parent=15 // pred_fallthru
          _
        // Predicated region
        $region21: #{tpu_custom_call.1} parent=15 // pred_check
          %p198 = pneg %p94
        $region22: #{tpu_custom_call.1} parent=15 // pred_check_branch
          %200 = sbr.rel (%p198) target = $region24
        $region23: #{tpu_custom_call.1} parent=15 // pred_region
          %s201 = sand.u32 %s84, 1
          %s202 = scalar_lea.sflag [#allocation4], %s201
          %s203 = sand.u32 %s84, 1
          %s204 = smul.addr %s203, 64
          %s205 = scalar_lea.vmem [#allocation3], %s204
          %207 = vsyncadd %s202, 0
          %s208 = smul.addr %s26, 8
          %s209 = smul.addr %s208, 8
          %s210 = scalar_lea.hbm %s1, %s209
          %s211 = sshll.u32 %s210, 4
          %s212 = int_to_ptr.hbm [resolvable:$true] %s211
          %s213 = sshll.u32 %s205, 4
          %s214 = int_to_ptr.vmem [resolvable:$true] %s213
          %219 = dma.hbm_to_vmem [thread:$0]  %s212, 1024, %s214, %s202, 128, 128, 8
        $region24: #{tpu_custom_call.1} parent=15 // pred_fallthru
          _
        // Predicated region
        $region25: #{tpu_custom_call.1} parent=15 // pred_check
          %p220 = pneg %p124
        $region26: #{tpu_custom_call.1} parent=15 // pred_check_branch
          %222 = sbr.rel (%p220) target = $region28
        $region27: #{tpu_custom_call.1} parent=15 // pred_region
          %s223 = sand.u32 %s114, 1
          %s224 = scalar_lea.sflag [#allocation7], %s223
          %s225 = sand.u32 %s114, 1
          %s226 = smul.addr %s225, 8
          %s227 = scalar_lea.vmem [#allocation6], %s226
          %229 = vsyncadd %s224, 0
          %s230 = sadd.s32 %s28, %s26
          %s231 = smul.addr %s25, 4
          %s232 = sadd.s32 %s230, %s231
          %s233 = smul.addr %s232, 8
          %s234 = scalar_lea.hbm %s2, %s233
          %s236 = sshll.u32 %s234, 4
          %s237 = int_to_ptr.hbm [resolvable:$true] %s236
          %s238 = sshll.u32 %s227, 4
          %s239 = int_to_ptr.vmem [resolvable:$true] %s238
          %241 = dma.hbm_to_vmem [thread:$0]  %s237, 128, %s239, %s224
        $region28: #{tpu_custom_call.1} parent=15 // pred_fallthru
          _
      $region16: #{tpu_custom_call.1} parent=5 // pred_fallthru
        _
      %p242 = scmp.le.s32.totalorder 1, %s18
      %p243 = scmp.lt.s32.totalorder %s18, 9
      %p244 = pnand %p242, %p243
      %p245 = pneg %p244
      // Predicated region
      $region29: #{tpu_custom_call.1} parent=5 // pred_check
        _
      $region30: #{tpu_custom_call.1} parent=5 // pred_check_branch
        %247 = sbr.rel (%p244) target = $region32
      $region31: #{tpu_custom_call.1} parent=5 // pred_region
        %s248 = ssub.s32 %s18, 1
        %s249 = sand.u32 %s87, 1
        %s250 = scalar_lea.sflag [#allocation4], %s249
        %s251 = sand.u32 %s87, 1
        %s252 = smul.addr %s251, 64
        %s253 = scalar_lea.vmem [#allocation3], %s252
        // Predicated region
        $region33: #{tpu_custom_call.1} parent=31 // pred_check
          %p254 = pneg %p100
        $region34: #{tpu_custom_call.1} parent=31 // pred_check_branch
          %256 = sbr.rel (%p254) target = $region36
        $region35: #{tpu_custom_call.1} parent=31 // pred_region
          %258 = dma.done %s250, 1024
        $region36: #{tpu_custom_call.1} parent=31 // pred_fallthru
          _
        %s259 = sand.u32 %s117, 1
        %s260 = scalar_lea.sflag [#allocation7], %s259
        %s261 = sand.u32 %s117, 1
        %s262 = smul.addr %s261, 8
        %s263 = scalar_lea.vmem [#allocation6], %s262
        // Predicated region
        $region37: #{tpu_custom_call.1} parent=31 // pred_check
          %p264 = pneg %p130
        $region38: #{tpu_custom_call.1} parent=31 // pred_check_branch
          %266 = sbr.rel (%p264) target = $region40
        $region39: #{tpu_custom_call.1} parent=31 // pred_region
          %268 = dma.done %s260, 128
        $region40: #{tpu_custom_call.1} parent=31 // pred_fallthru
          _
        %s269 = smul.u32 16, %s31
        %p270 = scmp.lt.s32.totalorder %s29, 1
        %s271 = scalar_select %p270, %s29, 1
        %p272 = scmp.lt.s32.totalorder %s30, 3
        %s273 = scalar_select %p272, %s30, 3
        %p274 = scmp.lt.s32.totalorder %s269, 15
        %s275 = scalar_select %p274, %s269, 15
        %s276 = smul.addr %s273, 16
        %s277 = sadd.s32 %s275, %s276
        %s278 = smul.addr %s271, 64
        %s279 = sadd.s32 %s277, %s278
        %s280 = smul.addr %s279, 8
        %s281 = scalar_lea.vmem %s0, %s280
        %p282 = pneg %p74
        %p283 = pneg %p71
        %s284 = sand.u32 %s87, 1
        %s285 = scalar_lea.sflag [#allocation4], %s284
        %s286 = sand.u32 %s87, 1
        %s287 = smul.addr %s286, 64
        %s288 = scalar_lea.vmem [#allocation3], %s287
        %p289 = pneg %p100
        %p290 = pneg %p97
        %s291 = sand.u32 %s117, 1
        %s292 = scalar_lea.sflag [#allocation7], %s291
        %s293 = sand.u32 %s117, 1
        %s294 = smul.addr %s293, 8
        %s295 = scalar_lea.vmem [#allocation6], %s294
        %p296 = pneg %p130
        %p297 = pneg %p127
        %p298 = pneg %p162
        %p299 = pneg %p159
        %s300 = sand.u32 %s149, 1
        %s301 = scalar_lea.sflag [#allocation5], %s300
        %s302 = sand.u32 %s149, 1
        %s303 = smul.addr %s302, 1024
        %s304 = scalar_lea.vmem [#allocation8], %s303
        %s305 = smul.u32 16, %s31
        %p306 = scmp.lt.s32.totalorder %s29, 1
        %s307 = scalar_select %p306, %s29, 1
        %p308 = scmp.lt.s32.totalorder %s30, 3
        %s309 = scalar_select %p308, %s30, 3
        %p310 = scmp.lt.s32.totalorder %s305, 15
        %s311 = scalar_select %p310, %s305, 15
        %s312 = smul.addr %s309, 16
        %s313 = sadd.s32 %s311, %s312
        %s314 = smul.addr %s307, 64
        %s315 = sadd.s32 %s313, %s314
        %s316 = smul.addr %s315, 8
        %s317 = scalar_lea.vmem %s0, %s316
        %s318 = smul.u32 16, %s31
        %s319 = smul.u32 16, %s31
        %p320 = scmp.eq.s32.totalorder %s32, 0
        // Predicated region
        $region41: #{tpu_custom_call.1} parent=31 // pred_check
          %p321 = pneg %p320
        $region42: #{tpu_custom_call.1} parent=31 // pred_check_branch
          %323 = sbr.rel (%p321) target = $region44
        $region43: #{tpu_custom_call.1} parent=31 // pred_region
          %v324 = vld [vmem:[%s317] sm:$0xff]
          %v325 = vld [vmem:[%s317 + $0x8] sm:$0xff]
          %v326 = vld [vmem:[%s317 + $0x10] sm:$0xff]
          %v327 = vld [vmem:[%s317 + $0x18] sm:$0xff]
          %v328 = vld [vmem:[%s317 + $0x20] sm:$0xff]
          %v329 = vld [vmem:[%s317 + $0x28] sm:$0xff]
          %v330 = vld [vmem:[%s317 + $0x30] sm:$0xff]
          %v331 = vld [vmem:[%s317 + $0x38] sm:$0xff]
          %v332 = vld [vmem:[%s317 + $0x40] sm:$0xff]
          %v333 = vld [vmem:[%s317 + $0x48] sm:$0xff]
          %v334 = vld [vmem:[%s317 + $0x50] sm:$0xff]
          %v335 = vld [vmem:[%s317 + $0x58] sm:$0xff]
          %v336 = vld [vmem:[%s317 + $0x60] sm:$0xff]
          %v337 = vld [vmem:[%s317 + $0x68] sm:$0xff]
          %v338 = vld [vmem:[%s317 + $0x70] sm:$0xff]
          %v339 = vld [vmem:[%s317 + $0x78] sm:$0xff]
          %v340 = vld [vmem:[%s253] sm:$0xff]
          %vm341 = vcmask 64512
          %v343 = vsel %vm341, %v324, 0
          %v346 = vsel %vm341, %v325, 0
          %v349 = vsel %vm341, %v326, 0
          %v352 = vsel %vm341, %v327, 0
          %v355 = vsel %vm341, %v328, 0
          %v358 = vsel %vm341, %v329, 0
          %v361 = vsel %vm341, %v330, 0
          %v364 = vsel %vm341, %v331, 0
          %v367 = vsel %vm341, %v332, 0
          %v370 = vsel %vm341, %v333, 0
          %v373 = vsel %vm341, %v334, 0
          %v376 = vsel %vm341, %v335, 0
          %v379 = vsel %vm341, %v336, 0
          %v382 = vsel %vm341, %v337, 0
          %v385 = vsel %vm341, %v338, 0
          %v388 = vsel %vm341, %v339, 0
          %390 = vmatpush.msra.mxu0 0.0
          %391 = vmatpush.msra.mxu0 0.0
          %392 = vmatpush.msra.mxu0 0.0
          %393 = vmatpush.msra.mxu0 0.0
          %394 = vmatpush.msra.mxu0 0.0
          %395 = vmatpush.msra.mxu0 0.0
          %396 = vmatpush.msra.mxu0 0.0
          %397 = vmatpush.msra.mxu0 0.0
          %398 = vmatpush.msra.mxu0 0.0
          %399 = vmatpush.msra.mxu0 0.0
          %400 = vmatpush.msra.mxu0 0.0
          %401 = vmatpush.msra.mxu0 0.0
          %402 = vmatpush.msra.mxu0 0.0
          %403 = vmatpush.msra.mxu0 0.0
          %404 = vmatpush.msra.mxu0 0.0
          %405 = vmatpush.msra.mxu0 %v340
          %406 = vmatmul.f32.gmra.mxu0 %v343
          %v407 = vpop.f32.mrf.mxu0
          %v408 = vadd.f32 0.0, %v407
          %409 = vmatmul.f32.gmra.mxu0 %v346
          %v410 = vpop.f32.mrf.mxu0
          %v411 = vadd.f32 0.0, %v410
          %412 = vmatmul.f32.gmra.mxu0 %v349
          %v413 = vpop.f32.mrf.mxu0
          %v414 = vadd.f32 0.0, %v413
          %415 = vmatmul.f32.gmra.mxu0 %v352
          %v416 = vpop.f32.mrf.mxu0
          %v417 = vadd.f32 0.0, %v416
          %418 = vmatmul.f32.gmra.mxu0 %v355
          %v419 = vpop.f32.mrf.mxu0
          %v420 = vadd.f32 0.0, %v419
          %421 = vmatmul.f32.gmra.mxu0 %v358
          %v422 = vpop.f32.mrf.mxu0
          %v423 = vadd.f32 0.0, %v422
          %424 = vmatmul.f32.gmra.mxu0 %v361
          %v425 = vpop.f32.mrf.mxu0
          %v426 = vadd.f32 0.0, %v425
          %427 = vmatmul.f32.gmra.mxu0 %v364
          %v428 = vpop.f32.mrf.mxu0
          %v429 = vadd.f32 0.0, %v428
          %430 = vmatmul.f32.gmra.mxu0 %v367
          %v431 = vpop.f32.mrf.mxu0
          %v432 = vadd.f32 0.0, %v431
          %433 = vmatmul.f32.gmra.mxu0 %v370
          %v434 = vpop.f32.mrf.mxu0
          %v435 = vadd.f32 0.0, %v434
          %436 = vmatmul.f32.gmra.mxu0 %v373
          %v437 = vpop.f32.mrf.mxu0
          %v438 = vadd.f32 0.0, %v437
          %439 = vmatmul.f32.gmra.mxu0 %v376
          %v440 = vpop.f32.mrf.mxu0
          %v441 = vadd.f32 0.0, %v440
          %442 = vmatmul.f32.gmra.mxu0 %v379
          %v443 = vpop.f32.mrf.mxu0
          %v444 = vadd.f32 0.0, %v443
          %445 = vmatmul.f32.gmra.mxu0 %v382
          %v446 = vpop.f32.mrf.mxu0
          %v447 = vadd.f32 0.0, %v446
          %448 = vmatmul.f32.gmra.mxu0 %v385
          %v449 = vpop.f32.mrf.mxu0
          %v450 = vadd.f32 0.0, %v449
          %451 = vmatmul.f32.gmra.mxu0 %v388
          %v452 = vpop.f32.mrf.mxu0
          %v453 = vadd.f32 0.0, %v452
          %454 = vdwg.mxu0
          %455 = vst.msk [vmem:[#allocation2] sm:$0xff] %vm341, %v408
          %456 = vst.msk [vmem:[#allocation2 + $0x8] sm:$0xff] %vm341, %v411
          %457 = vst.msk [vmem:[#allocation2 + $0x10] sm:$0xff] %vm341, %v414
          %458 = vst.msk [vmem:[#allocation2 + $0x18] sm:$0xff] %vm341, %v417
          %459 = vst.msk [vmem:[#allocation2 + $0x20] sm:$0xff] %vm341, %v420
          %460 = vst.msk [vmem:[#allocation2 + $0x28] sm:$0xff] %vm341, %v423
          %461 = vst.msk [vmem:[#allocation2 + $0x30] sm:$0xff] %vm341, %v426
          %462 = vst.msk [vmem:[#allocation2 + $0x38] sm:$0xff] %vm341, %v429
          %463 = vst.msk [vmem:[#allocation2 + $0x40] sm:$0xff] %vm341, %v432
          %464 = vst.msk [vmem:[#allocation2 + $0x48] sm:$0xff] %vm341, %v435
          %465 = vst.msk [vmem:[#allocation2 + $0x50] sm:$0xff] %vm341, %v438
          %466 = vst.msk [vmem:[#allocation2 + $0x58] sm:$0xff] %vm341, %v441
          %467 = vst.msk [vmem:[#allocation2 + $0x60] sm:$0xff] %vm341, %v444
          %468 = vst.msk [vmem:[#allocation2 + $0x68] sm:$0xff] %vm341, %v447
          %469 = vst.msk [vmem:[#allocation2 + $0x70] sm:$0xff] %vm341, %v450
          %470 = vst.msk [vmem:[#allocation2 + $0x78] sm:$0xff] %vm341, %v453
          %s471 = scalar_lea.vmem %s253, 8 [#allocation3]
          %v472 = vld [vmem:[%s471] sm:$0xff]
          %473 = vmatpush.msra.mxu0 0.0
          %474 = vmatpush.msra.mxu0 0.0
          %475 = vmatpush.msra.mxu0 0.0
          %476 = vmatpush.msra.mxu0 0.0
          %477 = vmatpush.msra.mxu0 0.0
          %478 = vmatpush.msra.mxu0 0.0
          %479 = vmatpush.msra.mxu0 0.0
          %480 = vmatpush.msra.mxu0 0.0
          %481 = vmatpush.msra.mxu0 0.0
          %482 = vmatpush.msra.mxu0 0.0
          %483 = vmatpush.msra.mxu0 0.0
          %484 = vmatpush.msra.mxu0 0.0
          %485 = vmatpush.msra.mxu0 0.0
          %486 = vmatpush.msra.mxu0 0.0
          %487 = vmatpush.msra.mxu0 0.0
          %488 = vmatpush.msra.mxu0 %v472
          %489 = vmatmul.f32.gmra.mxu0 %v343
          %v490 = vpop.f32.mrf.mxu0
          %v491 = vadd.f32 0.0, %v490
          %492 = vmatmul.f32.gmra.mxu0 %v346
          %v493 = vpop.f32.mrf.mxu0
          %v494 = vadd.f32 0.0, %v493
          %495 = vmatmul.f32.gmra.mxu0 %v349
          %v496 = vpop.f32.mrf.mxu0
          %v497 = vadd.f32 0.0, %v496
          %498 = vmatmul.f32.gmra.mxu0 %v352
          %v499 = vpop.f32.mrf.mxu0
          %v500 = vadd.f32 0.0, %v499
          %501 = vmatmul.f32.gmra.mxu0 %v355
          %v502 = vpop.f32.mrf.mxu0
          %v503 = vadd.f32 0.0, %v502
          %504 = vmatmul.f32.gmra.mxu0 %v358
          %v505 = vpop.f32.mrf.mxu0
          %v506 = vadd.f32 0.0, %v505
          %507 = vmatmul.f32.gmra.mxu0 %v361
          %v508 = vpop.f32.mrf.mxu0
          %v509 = vadd.f32 0.0, %v508
          %510 = vmatmul.f32.gmra.mxu0 %v364
          %v511 = vpop.f32.mrf.mxu0
          %v512 = vadd.f32 0.0, %v511
          %513 = vmatmul.f32.gmra.mxu0 %v367
          %v514 = vpop.f32.mrf.mxu0
          %v515 = vadd.f32 0.0, %v514
          %516 = vmatmul.f32.gmra.mxu0 %v370
          %v517 = vpop.f32.mrf.mxu0
          %v518 = vadd.f32 0.0, %v517
          %519 = vmatmul.f32.gmra.mxu0 %v373
          %v520 = vpop.f32.mrf.mxu0
          %v521 = vadd.f32 0.0, %v520
          %522 = vmatmul.f32.gmra.mxu0 %v376
          %v523 = vpop.f32.mrf.mxu0
          %v524 = vadd.f32 0.0, %v523
          %525 = vmatmul.f32.gmra.mxu0 %v379
          %v526 = vpop.f32.mrf.mxu0
          %v527 = vadd.f32 0.0, %v526
          %528 = vmatmul.f32.gmra.mxu0 %v382
          %v529 = vpop.f32.mrf.mxu0
          %v530 = vadd.f32 0.0, %v529
          %531 = vmatmul.f32.gmra.mxu0 %v385
          %v532 = vpop.f32.mrf.mxu0
          %v533 = vadd.f32 0.0, %v532
          %534 = vmatmul.f32.gmra.mxu0 %v388
          %v535 = vpop.f32.mrf.mxu0
          %v536 = vadd.f32 0.0, %v535
          %537 = vdwg.mxu0
          %538 = vst.msk [vmem:[#allocation2 + $0x80] sm:$0xff] %vm341, %v491
          %539 = vst.msk [vmem:[#allocation2 + $0x88] sm:$0xff] %vm341, %v494
          %540 = vst.msk [vmem:[#allocation2 + $0x90] sm:$0xff] %vm341, %v497
          %541 = vst.msk [vmem:[#allocation2 + $0x98] sm:$0xff] %vm341, %v500
          %542 = vst.msk [vmem:[#allocation2 + $0xa0] sm:$0xff] %vm341, %v503
          %543 = vst.msk [vmem:[#allocation2 + $0xa8] sm:$0xff] %vm341, %v506
          %544 = vst.msk [vmem:[#allocation2 + $0xb0] sm:$0xff] %vm341, %v509
          %545 = vst.msk [vmem:[#allocation2 + $0xb8] sm:$0xff] %vm341, %v512
          %546 = vst.msk [vmem:[#allocation2 + $0xc0] sm:$0xff] %vm341, %v515
          %547 = vst.msk [vmem:[#allocation2 + $0xc8] sm:$0xff] %vm341, %v518
          %548 = vst.msk [vmem:[#allocation2 + $0xd0] sm:$0xff] %vm341, %v521
          %549 = vst.msk [vmem:[#allocation2 + $0xd8] sm:$0xff] %vm341, %v524
          %550 = vst.msk [vmem:[#allocation2 + $0xe0] sm:$0xff] %vm341, %v527
          %551 = vst.msk [vmem:[#allocation2 + $0xe8] sm:$0xff] %vm341, %v530
          %552 = vst.msk [vmem:[#allocation2 + $0xf0] sm:$0xff] %vm341, %v533
          %553 = vst.msk [vmem:[#allocation2 + $0xf8] sm:$0xff] %vm341, %v536
          %s554 = scalar_lea.vmem %s253, 16 [#allocation3]
          %v555 = vld [vmem:[%s554] sm:$0xff]
          %556 = vmatpush.msra.mxu0 0.0
          %557 = vmatpush.msra.mxu0 0.0
          %558 = vmatpush.msra.mxu0 0.0
          %559 = vmatpush.msra.mxu0 0.0
          %560 = vmatpush.msra.mxu0 0.0
          %561 = vmatpush.msra.mxu0 0.0
          %562 = vmatpush.msra.mxu0 0.0
          %563 = vmatpush.msra.mxu0 0.0
          %564 = vmatpush.msra.mxu0 0.0
          %565 = vmatpush.msra.mxu0 0.0
          %566 = vmatpush.msra.mxu0 0.0
          %567 = vmatpush.msra.mxu0 0.0
          %568 = vmatpush.msra.mxu0 0.0
          %569 = vmatpush.msra.mxu0 0.0
          %570 = vmatpush.msra.mxu0 0.0
          %571 = vmatpush.msra.mxu0 %v555
          %572 = vmatmul.f32.gmra.mxu0 %v343
          %v573 = vpop.f32.mrf.mxu0
          %v574 = vadd.f32 0.0, %v573
          %575 = vmatmul.f32.gmra.mxu0 %v346
          %v576 = vpop.f32.mrf.mxu0
          %v577 = vadd.f32 0.0, %v576
          %578 = vmatmul.f32.gmra.mxu0 %v349
          %v579 = vpop.f32.mrf.mxu0
          %v580 = vadd.f32 0.0, %v579
          %581 = vmatmul.f32.gmra.mxu0 %v352
          %v582 = vpop.f32.mrf.mxu0
          %v583 = vadd.f32 0.0, %v582
          %584 = vmatmul.f32.gmra.mxu0 %v355
          %v585 = vpop.f32.mrf.mxu0
          %v586 = vadd.f32 0.0, %v585
          %587 = vmatmul.f32.gmra.mxu0 %v358
          %v588 = vpop.f32.mrf.mxu0
          %v589 = vadd.f32 0.0, %v588
          %590 = vmatmul.f32.gmra.mxu0 %v361
          %v591 = vpop.f32.mrf.mxu0
          %v592 = vadd.f32 0.0, %v591
          %593 = vmatmul.f32.gmra.mxu0 %v364
          %v594 = vpop.f32.mrf.mxu0
          %v595 = vadd.f32 0.0, %v594
          %596 = vmatmul.f32.gmra.mxu0 %v367
          %v597 = vpop.f32.mrf.mxu0
          %v598 = vadd.f32 0.0, %v597
          %599 = vmatmul.f32.gmra.mxu0 %v370
          %v600 = vpop.f32.mrf.mxu0
          %v601 = vadd.f32 0.0, %v600
          %602 = vmatmul.f32.gmra.mxu0 %v373
          %v603 = vpop.f32.mrf.mxu0
          %v604 = vadd.f32 0.0, %v603
          %605 = vmatmul.f32.gmra.mxu0 %v376
          %v606 = vpop.f32.mrf.mxu0
          %v607 = vadd.f32 0.0, %v606
          %608 = vmatmul.f32.gmra.mxu0 %v379
          %v609 = vpop.f32.mrf.mxu0
          %v610 = vadd.f32 0.0, %v609
          %611 = vmatmul.f32.gmra.mxu0 %v382
          %v612 = vpop.f32.mrf.mxu0
          %v613 = vadd.f32 0.0, %v612
          %614 = vmatmul.f32.gmra.mxu0 %v385
          %v615 = vpop.f32.mrf.mxu0
          %v616 = vadd.f32 0.0, %v615
          %617 = vmatmul.f32.gmra.mxu0 %v388
          %v618 = vpop.f32.mrf.mxu0
          %v619 = vadd.f32 0.0, %v618
          %620 = vdwg.mxu0
          %621 = vst.msk [vmem:[#allocation2 + $0x100] sm:$0xff] %vm341, %v574
          %622 = vst.msk [vmem:[#allocation2 + $0x108] sm:$0xff] %vm341, %v577
          %623 = vst.msk [vmem:[#allocation2 + $0x110] sm:$0xff] %vm341, %v580
          %624 = vst.msk [vmem:[#allocation2 + $0x118] sm:$0xff] %vm341, %v583
          %625 = vst.msk [vmem:[#allocation2 + $0x120] sm:$0xff] %vm341, %v586
          %626 = vst.msk [vmem:[#allocation2 + $0x128] sm:$0xff] %vm341, %v589
          %627 = vst.msk [vmem:[#allocation2 + $0x130] sm:$0xff] %vm341, %v592
          %628 = vst.msk [vmem:[#allocation2 + $0x138] sm:$0xff] %vm341, %v595
          %629 = vst.msk [vmem:[#allocation2 + $0x140] sm:$0xff] %vm341, %v598
          %630 = vst.msk [vmem:[#allocation2 + $0x148] sm:$0xff] %vm341, %v601
          %631 = vst.msk [vmem:[#allocation2 + $0x150] sm:$0xff] %vm341, %v604
          %632 = vst.msk [vmem:[#allocation2 + $0x158] sm:$0xff] %vm341, %v607
          %633 = vst.msk [vmem:[#allocation2 + $0x160] sm:$0xff] %vm341, %v610
          %634 = vst.msk [vmem:[#allocation2 + $0x168] sm:$0xff] %vm341, %v613
          %635 = vst.msk [vmem:[#allocation2 + $0x170] sm:$0xff] %vm341, %v616
          %636 = vst.msk [vmem:[#allocation2 + $0x178] sm:$0xff] %vm341, %v619
          %s637 = scalar_lea.vmem %s253, 24 [#allocation3]
          %v638 = vld [vmem:[%s637] sm:$0xff]
          %639 = vmatpush.msra.mxu0 0.0
          %640 = vmatpush.msra.mxu0 0.0
          %641 = vmatpush.msra.mxu0 0.0
          %642 = vmatpush.msra.mxu0 0.0
          %643 = vmatpush.msra.mxu0 0.0
          %644 = vmatpush.msra.mxu0 0.0
          %645 = vmatpush.msra.mxu0 0.0
          %646 = vmatpush.msra.mxu0 0.0
          %647 = vmatpush.msra.mxu0 0.0
          %648 = vmatpush.msra.mxu0 0.0
          %649 = vmatpush.msra.mxu0 0.0
          %650 = vmatpush.msra.mxu0 0.0
          %651 = vmatpush.msra.mxu0 0.0
          %652 = vmatpush.msra.mxu0 0.0
          %653 = vmatpush.msra.mxu0 0.0
          %654 = vmatpush.msra.mxu0 %v638
          %655 = vmatmul.f32.gmra.mxu0 %v343
          %v656 = vpop.f32.mrf.mxu0
          %v657 = vadd.f32 0.0, %v656
          %658 = vmatmul.f32.gmra.mxu0 %v346
          %v659 = vpop.f32.mrf.mxu0
          %v660 = vadd.f32 0.0, %v659
          %661 = vmatmul.f32.gmra.mxu0 %v349
          %v662 = vpop.f32.mrf.mxu0
          %v663 = vadd.f32 0.0, %v662
          %664 = vmatmul.f32.gmra.mxu0 %v352
          %v665 = vpop.f32.mrf.mxu0
          %v666 = vadd.f32 0.0, %v665
          %667 = vmatmul.f32.gmra.mxu0 %v355
          %v668 = vpop.f32.mrf.mxu0
          %v669 = vadd.f32 0.0, %v668
          %670 = vmatmul.f32.gmra.mxu0 %v358
          %v671 = vpop.f32.mrf.mxu0
          %v672 = vadd.f32 0.0, %v671
          %673 = vmatmul.f32.gmra.mxu0 %v361
          %v674 = vpop.f32.mrf.mxu0
          %v675 = vadd.f32 0.0, %v674
          %676 = vmatmul.f32.gmra.mxu0 %v364
          %v677 = vpop.f32.mrf.mxu0
          %v678 = vadd.f32 0.0, %v677
          %679 = vmatmul.f32.gmra.mxu0 %v367
          %v680 = vpop.f32.mrf.mxu0
          %v681 = vadd.f32 0.0, %v680
          %682 = vmatmul.f32.gmra.mxu0 %v370
          %v683 = vpop.f32.mrf.mxu0
          %v684 = vadd.f32 0.0, %v683
          %685 = vmatmul.f32.gmra.mxu0 %v373
          %v686 = vpop.f32.mrf.mxu0
          %v687 = vadd.f32 0.0, %v686
          %688 = vmatmul.f32.gmra.mxu0 %v376
          %v689 = vpop.f32.mrf.mxu0
          %v690 = vadd.f32 0.0, %v689
          %691 = vmatmul.f32.gmra.mxu0 %v379
          %v692 = vpop.f32.mrf.mxu0
          %v693 = vadd.f32 0.0, %v692
          %694 = vmatmul.f32.gmra.mxu0 %v382
          %v695 = vpop.f32.mrf.mxu0
          %v696 = vadd.f32 0.0, %v695
          %697 = vmatmul.f32.gmra.mxu0 %v385
          %v698 = vpop.f32.mrf.mxu0
          %v699 = vadd.f32 0.0, %v698
          %700 = vmatmul.f32.gmra.mxu0 %v388
          %v701 = vpop.f32.mrf.mxu0
          %v702 = vadd.f32 0.0, %v701
          %703 = vdwg.mxu0
          %704 = vst.msk [vmem:[#allocation2 + $0x180] sm:$0xff] %vm341, %v657
          %705 = vst.msk [vmem:[#allocation2 + $0x188] sm:$0xff] %vm341, %v660
          %706 = vst.msk [vmem:[#allocation2 + $0x190] sm:$0xff] %vm341, %v663
          %707 = vst.msk [vmem:[#allocation2 + $0x198] sm:$0xff] %vm341, %v666
          %708 = vst.msk [vmem:[#allocation2 + $0x1a0] sm:$0xff] %vm341, %v669
          %709 = vst.msk [vmem:[#allocation2 + $0x1a8] sm:$0xff] %vm341, %v672
          %710 = vst.msk [vmem:[#allocation2 + $0x1b0] sm:$0xff] %vm341, %v675
          %711 = vst.msk [vmem:[#allocation2 + $0x1b8] sm:$0xff] %vm341, %v678
          %712 = vst.msk [vmem:[#allocation2 + $0x1c0] sm:$0xff] %vm341, %v681
          %713 = vst.msk [vmem:[#allocation2 + $0x1c8] sm:$0xff] %vm341, %v684
          %714 = vst.msk [vmem:[#allocation2 + $0x1d0] sm:$0xff] %vm341, %v687
          %715 = vst.msk [vmem:[#allocation2 + $0x1d8] sm:$0xff] %vm341, %v690
          %716 = vst.msk [vmem:[#allocation2 + $0x1e0] sm:$0xff] %vm341, %v693
          %717 = vst.msk [vmem:[#allocation2 + $0x1e8] sm:$0xff] %vm341, %v696
          %718 = vst.msk [vmem:[#allocation2 + $0x1f0] sm:$0xff] %vm341, %v699
          %719 = vst.msk [vmem:[#allocation2 + $0x1f8] sm:$0xff] %vm341, %v702
          %s720 = scalar_lea.vmem %s253, 32 [#allocation3]
          %v721 = vld [vmem:[%s720] sm:$0xff]
          %722 = vmatpush.msra.mxu0 0.0
          %723 = vmatpush.msra.mxu0 0.0
          %724 = vmatpush.msra.mxu0 0.0
          %725 = vmatpush.msra.mxu0 0.0
          %726 = vmatpush.msra.mxu0 0.0
          %727 = vmatpush.msra.mxu0 0.0
          %728 = vmatpush.msra.mxu0 0.0
          %729 = vmatpush.msra.mxu0 0.0
          %730 = vmatpush.msra.mxu0 0.0
          %731 = vmatpush.msra.mxu0 0.0
          %732 = vmatpush.msra.mxu0 0.0
          %733 = vmatpush.msra.mxu0 0.0
          %734 = vmatpush.msra.mxu0 0.0
          %735 = vmatpush.msra.mxu0 0.0
          %736 = vmatpush.msra.mxu0 0.0
          %737 = vmatpush.msra.mxu0 %v721
          %738 = vmatmul.f32.gmra.mxu0 %v343
          %v739 = vpop.f32.mrf.mxu0
          %v740 = vadd.f32 0.0, %v739
          %741 = vmatmul.f32.gmra.mxu0 %v346
          %v742 = vpop.f32.mrf.mxu0
          %v743 = vadd.f32 0.0, %v742
          %744 = vmatmul.f32.gmra.mxu0 %v349
          %v745 = vpop.f32.mrf.mxu0
          %v746 = vadd.f32 0.0, %v745
          %747 = vmatmul.f32.gmra.mxu0 %v352
          %v748 = vpop.f32.mrf.mxu0
          %v749 = vadd.f32 0.0, %v748
          %750 = vmatmul.f32.gmra.mxu0 %v355
          %v751 = vpop.f32.mrf.mxu0
          %v752 = vadd.f32 0.0, %v751
          %753 = vmatmul.f32.gmra.mxu0 %v358
          %v754 = vpop.f32.mrf.mxu0
          %v755 = vadd.f32 0.0, %v754
          %756 = vmatmul.f32.gmra.mxu0 %v361
          %v757 = vpop.f32.mrf.mxu0
          %v758 = vadd.f32 0.0, %v757
          %759 = vmatmul.f32.gmra.mxu0 %v364
          %v760 = vpop.f32.mrf.mxu0
          %v761 = vadd.f32 0.0, %v760
          %762 = vmatmul.f32.gmra.mxu0 %v367
          %v763 = vpop.f32.mrf.mxu0
          %v764 = vadd.f32 0.0, %v763
          %765 = vmatmul.f32.gmra.mxu0 %v370
          %v766 = vpop.f32.mrf.mxu0
          %v767 = vadd.f32 0.0, %v766
          %768 = vmatmul.f32.gmra.mxu0 %v373
          %v769 = vpop.f32.mrf.mxu0
          %v770 = vadd.f32 0.0, %v769
          %771 = vmatmul.f32.gmra.mxu0 %v376
          %v772 = vpop.f32.mrf.mxu0
          %v773 = vadd.f32 0.0, %v772
          %774 = vmatmul.f32.gmra.mxu0 %v379
          %v775 = vpop.f32.mrf.mxu0
          %v776 = vadd.f32 0.0, %v775
          %777 = vmatmul.f32.gmra.mxu0 %v382
          %v778 = vpop.f32.mrf.mxu0
          %v779 = vadd.f32 0.0, %v778
          %780 = vmatmul.f32.gmra.mxu0 %v385
          %v781 = vpop.f32.mrf.mxu0
          %v782 = vadd.f32 0.0, %v781
          %783 = vmatmul.f32.gmra.mxu0 %v388
          %v784 = vpop.f32.mrf.mxu0
          %v785 = vadd.f32 0.0, %v784
          %786 = vdwg.mxu0
          %787 = vst.msk [vmem:[#allocation2 + $0x200] sm:$0xff] %vm341, %v740
          %788 = vst.msk [vmem:[#allocation2 + $0x208] sm:$0xff] %vm341, %v743
          %789 = vst.msk [vmem:[#allocation2 + $0x210] sm:$0xff] %vm341, %v746
          %790 = vst.msk [vmem:[#allocation2 + $0x218] sm:$0xff] %vm341, %v749
          %791 = vst.msk [vmem:[#allocation2 + $0x220] sm:$0xff] %vm341, %v752
          %792 = vst.msk [vmem:[#allocation2 + $0x228] sm:$0xff] %vm341, %v755
          %793 = vst.msk [vmem:[#allocation2 + $0x230] sm:$0xff] %vm341, %v758
          %794 = vst.msk [vmem:[#allocation2 + $0x238] sm:$0xff] %vm341, %v761
          %795 = vst.msk [vmem:[#allocation2 + $0x240] sm:$0xff] %vm341, %v764
          %796 = vst.msk [vmem:[#allocation2 + $0x248] sm:$0xff] %vm341, %v767
          %797 = vst.msk [vmem:[#allocation2 + $0x250] sm:$0xff] %vm341, %v770
          %798 = vst.msk [vmem:[#allocation2 + $0x258] sm:$0xff] %vm341, %v773
          %799 = vst.msk [vmem:[#allocation2 + $0x260] sm:$0xff] %vm341, %v776
          %800 = vst.msk [vmem:[#allocation2 + $0x268] sm:$0xff] %vm341, %v779
          %801 = vst.msk [vmem:[#allocation2 + $0x270] sm:$0xff] %vm341, %v782
          %802 = vst.msk [vmem:[#allocation2 + $0x278] sm:$0xff] %vm341, %v785
          %s803 = scalar_lea.vmem %s253, 40 [#allocation3]
          %v804 = vld [vmem:[%s803] sm:$0xff]
          %805 = vmatpush.msra.mxu0 0.0
          %806 = vmatpush.msra.mxu0 0.0
          %807 = vmatpush.msra.mxu0 0.0
          %808 = vmatpush.msra.mxu0 0.0
          %809 = vmatpush.msra.mxu0 0.0
          %810 = vmatpush.msra.mxu0 0.0
          %811 = vmatpush.msra.mxu0 0.0
          %812 = vmatpush.msra.mxu0 0.0
          %813 = vmatpush.msra.mxu0 0.0
          %814 = vmatpush.msra.mxu0 0.0
          %815 = vmatpush.msra.mxu0 0.0
          %816 = vmatpush.msra.mxu0 0.0
          %817 = vmatpush.msra.mxu0 0.0
          %818 = vmatpush.msra.mxu0 0.0
          %819 = vmatpush.msra.mxu0 0.0
          %820 = vmatpush.msra.mxu0 %v804
          %821 = vmatmul.f32.gmra.mxu0 %v343
          %v822 = vpop.f32.mrf.mxu0
          %v823 = vadd.f32 0.0, %v822
          %824 = vmatmul.f32.gmra.mxu0 %v346
          %v825 = vpop.f32.mrf.mxu0
          %v826 = vadd.f32 0.0, %v825
          %827 = vmatmul.f32.gmra.mxu0 %v349
          %v828 = vpop.f32.mrf.mxu0
          %v829 = vadd.f32 0.0, %v828
          %830 = vmatmul.f32.gmra.mxu0 %v352
          %v831 = vpop.f32.mrf.mxu0
          %v832 = vadd.f32 0.0, %v831
          %833 = vmatmul.f32.gmra.mxu0 %v355
          %v834 = vpop.f32.mrf.mxu0
          %v835 = vadd.f32 0.0, %v834
          %836 = vmatmul.f32.gmra.mxu0 %v358
          %v837 = vpop.f32.mrf.mxu0
          %v838 = vadd.f32 0.0, %v837
          %839 = vmatmul.f32.gmra.mxu0 %v361
          %v840 = vpop.f32.mrf.mxu0
          %v841 = vadd.f32 0.0, %v840
          %842 = vmatmul.f32.gmra.mxu0 %v364
          %v843 = vpop.f32.mrf.mxu0
          %v844 = vadd.f32 0.0, %v843
          %845 = vmatmul.f32.gmra.mxu0 %v367
          %v846 = vpop.f32.mrf.mxu0
          %v847 = vadd.f32 0.0, %v846
          %848 = vmatmul.f32.gmra.mxu0 %v370
          %v849 = vpop.f32.mrf.mxu0
          %v850 = vadd.f32 0.0, %v849
          %851 = vmatmul.f32.gmra.mxu0 %v373
          %v852 = vpop.f32.mrf.mxu0
          %v853 = vadd.f32 0.0, %v852
          %854 = vmatmul.f32.gmra.mxu0 %v376
          %v855 = vpop.f32.mrf.mxu0
          %v856 = vadd.f32 0.0, %v855
          %857 = vmatmul.f32.gmra.mxu0 %v379
          %v858 = vpop.f32.mrf.mxu0
          %v859 = vadd.f32 0.0, %v858
          %860 = vmatmul.f32.gmra.mxu0 %v382
          %v861 = vpop.f32.mrf.mxu0
          %v862 = vadd.f32 0.0, %v861
          %863 = vmatmul.f32.gmra.mxu0 %v385
          %v864 = vpop.f32.mrf.mxu0
          %v865 = vadd.f32 0.0, %v864
          %866 = vmatmul.f32.gmra.mxu0 %v388
          %v867 = vpop.f32.mrf.mxu0
          %v868 = vadd.f32 0.0, %v867
          %869 = vdwg.mxu0
          %870 = vst.msk [vmem:[#allocation2 + $0x280] sm:$0xff] %vm341, %v823
          %871 = vst.msk [vmem:[#allocation2 + $0x288] sm:$0xff] %vm341, %v826
          %872 = vst.msk [vmem:[#allocation2 + $0x290] sm:$0xff] %vm341, %v829
          %873 = vst.msk [vmem:[#allocation2 + $0x298] sm:$0xff] %vm341, %v832
          %874 = vst.msk [vmem:[#allocation2 + $0x2a0] sm:$0xff] %vm341, %v835
          %875 = vst.msk [vmem:[#allocation2 + $0x2a8] sm:$0xff] %vm341, %v838
          %876 = vst.msk [vmem:[#allocation2 + $0x2b0] sm:$0xff] %vm341, %v841
          %877 = vst.msk [vmem:[#allocation2 + $0x2b8] sm:$0xff] %vm341, %v844
          %878 = vst.msk [vmem:[#allocation2 + $0x2c0] sm:$0xff] %vm341, %v847
          %879 = vst.msk [vmem:[#allocation2 + $0x2c8] sm:$0xff] %vm341, %v850
          %880 = vst.msk [vmem:[#allocation2 + $0x2d0] sm:$0xff] %vm341, %v853
          %881 = vst.msk [vmem:[#allocation2 + $0x2d8] sm:$0xff] %vm341, %v856
          %882 = vst.msk [vmem:[#allocation2 + $0x2e0] sm:$0xff] %vm341, %v859
          %883 = vst.msk [vmem:[#allocation2 + $0x2e8] sm:$0xff] %vm341, %v862
          %884 = vst.msk [vmem:[#allocation2 + $0x2f0] sm:$0xff] %vm341, %v865
          %885 = vst.msk [vmem:[#allocation2 + $0x2f8] sm:$0xff] %vm341, %v868
          %s886 = scalar_lea.vmem %s253, 48 [#allocation3]
          %v887 = vld [vmem:[%s886] sm:$0xff]
          %888 = vmatpush.msra.mxu0 0.0
          %889 = vmatpush.msra.mxu0 0.0
          %890 = vmatpush.msra.mxu0 0.0
          %891 = vmatpush.msra.mxu0 0.0
          %892 = vmatpush.msra.mxu0 0.0
          %893 = vmatpush.msra.mxu0 0.0
          %894 = vmatpush.msra.mxu0 0.0
          %895 = vmatpush.msra.mxu0 0.0
          %896 = vmatpush.msra.mxu0 0.0
          %897 = vmatpush.msra.mxu0 0.0
          %898 = vmatpush.msra.mxu0 0.0
          %899 = vmatpush.msra.mxu0 0.0
          %900 = vmatpush.msra.mxu0 0.0
          %901 = vmatpush.msra.mxu0 0.0
          %902 = vmatpush.msra.mxu0 0.0
          %903 = vmatpush.msra.mxu0 %v887
          %904 = vmatmul.f32.gmra.mxu0 %v343
          %v905 = vpop.f32.mrf.mxu0
          %v906 = vadd.f32 0.0, %v905
          %907 = vmatmul.f32.gmra.mxu0 %v346
          %v908 = vpop.f32.mrf.mxu0
          %v909 = vadd.f32 0.0, %v908
          %910 = vmatmul.f32.gmra.mxu0 %v349
          %v911 = vpop.f32.mrf.mxu0
          %v912 = vadd.f32 0.0, %v911
          %913 = vmatmul.f32.gmra.mxu0 %v352
          %v914 = vpop.f32.mrf.mxu0
          %v915 = vadd.f32 0.0, %v914
          %916 = vmatmul.f32.gmra.mxu0 %v355
          %v917 = vpop.f32.mrf.mxu0
          %v918 = vadd.f32 0.0, %v917
          %919 = vmatmul.f32.gmra.mxu0 %v358
          %v920 = vpop.f32.mrf.mxu0
          %v921 = vadd.f32 0.0, %v920
          %922 = vmatmul.f32.gmra.mxu0 %v361
          %v923 = vpop.f32.mrf.mxu0
          %v924 = vadd.f32 0.0, %v923
          %925 = vmatmul.f32.gmra.mxu0 %v364
          %v926 = vpop.f32.mrf.mxu0
          %v927 = vadd.f32 0.0, %v926
          %928 = vmatmul.f32.gmra.mxu0 %v367
          %v929 = vpop.f32.mrf.mxu0
          %v930 = vadd.f32 0.0, %v929
          %931 = vmatmul.f32.gmra.mxu0 %v370
          %v932 = vpop.f32.mrf.mxu0
          %v933 = vadd.f32 0.0, %v932
          %934 = vmatmul.f32.gmra.mxu0 %v373
          %v935 = vpop.f32.mrf.mxu0
          %v936 = vadd.f32 0.0, %v935
          %937 = vmatmul.f32.gmra.mxu0 %v376
          %v938 = vpop.f32.mrf.mxu0
          %v939 = vadd.f32 0.0, %v938
          %940 = vmatmul.f32.gmra.mxu0 %v379
          %v941 = vpop.f32.mrf.mxu0
          %v942 = vadd.f32 0.0, %v941
          %943 = vmatmul.f32.gmra.mxu0 %v382
          %v944 = vpop.f32.mrf.mxu0
          %v945 = vadd.f32 0.0, %v944
          %946 = vmatmul.f32.gmra.mxu0 %v385
          %v947 = vpop.f32.mrf.mxu0
          %v948 = vadd.f32 0.0, %v947
          %949 = vmatmul.f32.gmra.mxu0 %v388
          %v950 = vpop.f32.mrf.mxu0
          %v951 = vadd.f32 0.0, %v950
          %952 = vdwg.mxu0
          %953 = vst.msk [vmem:[#allocation2 + $0x300] sm:$0xff] %vm341, %v906
          %954 = vst.msk [vmem:[#allocation2 + $0x308] sm:$0xff] %vm341, %v909
          %955 = vst.msk [vmem:[#allocation2 + $0x310] sm:$0xff] %vm341, %v912
          %956 = vst.msk [vmem:[#allocation2 + $0x318] sm:$0xff] %vm341, %v915
          %957 = vst.msk [vmem:[#allocation2 + $0x320] sm:$0xff] %vm341, %v918
          %958 = vst.msk [vmem:[#allocation2 + $0x328] sm:$0xff] %vm341, %v921
          %959 = vst.msk [vmem:[#allocation2 + $0x330] sm:$0xff] %vm341, %v924
          %960 = vst.msk [vmem:[#allocation2 + $0x338] sm:$0xff] %vm341, %v927
          %961 = vst.msk [vmem:[#allocation2 + $0x340] sm:$0xff] %vm341, %v930
          %962 = vst.msk [vmem:[#allocation2 + $0x348] sm:$0xff] %vm341, %v933
          %963 = vst.msk [vmem:[#allocation2 + $0x350] sm:$0xff] %vm341, %v936
          %964 = vst.msk [vmem:[#allocation2 + $0x358] sm:$0xff] %vm341, %v939
          %965 = vst.msk [vmem:[#allocation2 + $0x360] sm:$0xff] %vm341, %v942
          %966 = vst.msk [vmem:[#allocation2 + $0x368] sm:$0xff] %vm341, %v945
          %967 = vst.msk [vmem:[#allocation2 + $0x370] sm:$0xff] %vm341, %v948
          %968 = vst.msk [vmem:[#allocation2 + $0x378] sm:$0xff] %vm341, %v951
          %s969 = scalar_lea.vmem %s253, 56 [#allocation3]
          %v970 = vld [vmem:[%s969] sm:$0xff]
          %971 = vmatpush.msra.mxu0 0.0
          %972 = vmatpush.msra.mxu0 0.0
          %973 = vmatpush.msra.mxu0 0.0
          %974 = vmatpush.msra.mxu0 0.0
          %975 = vmatpush.msra.mxu0 0.0
          %976 = vmatpush.msra.mxu0 0.0
          %977 = vmatpush.msra.mxu0 0.0
          %978 = vmatpush.msra.mxu0 0.0
          %979 = vmatpush.msra.mxu0 0.0
          %980 = vmatpush.msra.mxu0 0.0
          %981 = vmatpush.msra.mxu0 0.0
          %982 = vmatpush.msra.mxu0 0.0
          %983 = vmatpush.msra.mxu0 0.0
          %984 = vmatpush.msra.mxu0 0.0
          %985 = vmatpush.msra.mxu0 0.0
          %986 = vmatpush.msra.mxu0 %v970
          %987 = vmatmul.f32.gmra.mxu0 %v343
          %v988 = vpop.f32.mrf.mxu0
          %v989 = vadd.f32 0.0, %v988
          %990 = vmatmul.f32.gmra.mxu0 %v346
          %v991 = vpop.f32.mrf.mxu0
          %v992 = vadd.f32 0.0, %v991
          %993 = vmatmul.f32.gmra.mxu0 %v349
          %v994 = vpop.f32.mrf.mxu0
          %v995 = vadd.f32 0.0, %v994
          %996 = vmatmul.f32.gmra.mxu0 %v352
          %v997 = vpop.f32.mrf.mxu0
          %v998 = vadd.f32 0.0, %v997
          %999 = vmatmul.f32.gmra.mxu0 %v355
          %v1000 = vpop.f32.mrf.mxu0
          %v1001 = vadd.f32 0.0, %v1000
          %1002 = vmatmul.f32.gmra.mxu0 %v358
          %v1003 = vpop.f32.mrf.mxu0
          %v1004 = vadd.f32 0.0, %v1003
          %1005 = vmatmul.f32.gmra.mxu0 %v361
          %v1006 = vpop.f32.mrf.mxu0
          %v1007 = vadd.f32 0.0, %v1006
          %1008 = vmatmul.f32.gmra.mxu0 %v364
          %v1009 = vpop.f32.mrf.mxu0
          %v1010 = vadd.f32 0.0, %v1009
          %1011 = vmatmul.f32.gmra.mxu0 %v367
          %v1012 = vpop.f32.mrf.mxu0
          %v1013 = vadd.f32 0.0, %v1012
          %1014 = vmatmul.f32.gmra.mxu0 %v370
          %v1015 = vpop.f32.mrf.mxu0
          %v1016 = vadd.f32 0.0, %v1015
          %1017 = vmatmul.f32.gmra.mxu0 %v373
          %v1018 = vpop.f32.mrf.mxu0
          %v1019 = vadd.f32 0.0, %v1018
          %1020 = vmatmul.f32.gmra.mxu0 %v376
          %v1021 = vpop.f32.mrf.mxu0
          %v1022 = vadd.f32 0.0, %v1021
          %1023 = vmatmul.f32.gmra.mxu0 %v379
          %v1024 = vpop.f32.mrf.mxu0
          %v1025 = vadd.f32 0.0, %v1024
          %1026 = vmatmul.f32.gmra.mxu0 %v382
          %v1027 = vpop.f32.mrf.mxu0
          %v1028 = vadd.f32 0.0, %v1027
          %1029 = vmatmul.f32.gmra.mxu0 %v385
          %v1030 = vpop.f32.mrf.mxu0
          %v1031 = vadd.f32 0.0, %v1030
          %1032 = vmatmul.f32.gmra.mxu0 %v388
          %v1033 = vpop.f32.mrf.mxu0
          %v1034 = vadd.f32 0.0, %v1033
          %1035 = vdwg.mxu0
          %1036 = vst.msk [vmem:[#allocation2 + $0x380] sm:$0xff] %vm341, %v989
          %1037 = vst.msk [vmem:[#allocation2 + $0x388] sm:$0xff] %vm341, %v992
          %1038 = vst.msk [vmem:[#allocation2 + $0x390] sm:$0xff] %vm341, %v995
          %1039 = vst.msk [vmem:[#allocation2 + $0x398] sm:$0xff] %vm341, %v998
          %1040 = vst.msk [vmem:[#allocation2 + $0x3a0] sm:$0xff] %vm341, %v1001
          %1041 = vst.msk [vmem:[#allocation2 + $0x3a8] sm:$0xff] %vm341, %v1004
          %1042 = vst.msk [vmem:[#allocation2 + $0x3b0] sm:$0xff] %vm341, %v1007
          %1043 = vst.msk [vmem:[#allocation2 + $0x3b8] sm:$0xff] %vm341, %v1010
          %1044 = vst.msk [vmem:[#allocation2 + $0x3c0] sm:$0xff] %vm341, %v1013
          %1045 = vst.msk [vmem:[#allocation2 + $0x3c8] sm:$0xff] %vm341, %v1016
          %1046 = vst.msk [vmem:[#allocation2 + $0x3d0] sm:$0xff] %vm341, %v1019
          %1047 = vst.msk [vmem:[#allocation2 + $0x3d8] sm:$0xff] %vm341, %v1022
          %1048 = vst.msk [vmem:[#allocation2 + $0x3e0] sm:$0xff] %vm341, %v1025
          %1049 = vst.msk [vmem:[#allocation2 + $0x3e8] sm:$0xff] %vm341, %v1028
          %1050 = vst.msk [vmem:[#allocation2 + $0x3f0] sm:$0xff] %vm341, %v1031
          %1051 = vst.msk [vmem:[#allocation2 + $0x3f8] sm:$0xff] %vm341, %v1034
        $region44: #{tpu_custom_call.1} parent=31 // pred_fallthru
          _
        %v1052 = vld [vmem:[#allocation2] sm:$0xff]
        %v1053 = vld [vmem:[#allocation2 + $0x8] sm:$0xff]
        %v1054 = vld [vmem:[#allocation2 + $0x10] sm:$0xff]
        %v1055 = vld [vmem:[#allocation2 + $0x18] sm:$0xff]
        %v1056 = vld [vmem:[#allocation2 + $0x20] sm:$0xff]
        %v1057 = vld [vmem:[#allocation2 + $0x28] sm:$0xff]
        %v1058 = vld [vmem:[#allocation2 + $0x30] sm:$0xff]
        %v1059 = vld [vmem:[#allocation2 + $0x38] sm:$0xff]
        %v1060 = vld [vmem:[#allocation2 + $0x40] sm:$0xff]
        %v1061 = vld [vmem:[#allocation2 + $0x48] sm:$0xff]
        %v1062 = vld [vmem:[#allocation2 + $0x50] sm:$0xff]
        %v1063 = vld [vmem:[#allocation2 + $0x58] sm:$0xff]
        %v1064 = vld [vmem:[#allocation2 + $0x60] sm:$0xff]
        %v1065 = vld [vmem:[#allocation2 + $0x68] sm:$0xff]
        %v1066 = vld [vmem:[#allocation2 + $0x70] sm:$0xff]
        %v1067 = vld [vmem:[#allocation2 + $0x78] sm:$0xff]
        %v1068 = vld [vmem:[#allocation2 + $0x80] sm:$0xff]
        %v1069 = vld [vmem:[#allocation2 + $0x88] sm:$0xff]
        %v1070 = vld [vmem:[#allocation2 + $0x90] sm:$0xff]
        %v1071 = vld [vmem:[#allocation2 + $0x98] sm:$0xff]
        %v1072 = vld [vmem:[#allocation2 + $0xa0] sm:$0xff]
        %v1073 = vld [vmem:[#allocation2 + $0xa8] sm:$0xff]
        %v1074 = vld [vmem:[#allocation2 + $0xb0] sm:$0xff]
        %v1075 = vld [vmem:[#allocation2 + $0xb8] sm:$0xff]
        %v1076 = vld [vmem:[#allocation2 + $0xc0] sm:$0xff]
        %v1077 = vld [vmem:[#allocation2 + $0xc8] sm:$0xff]
        %v1078 = vld [vmem:[#allocation2 + $0xd0] sm:$0xff]
        %v1079 = vld [vmem:[#allocation2 + $0xd8] sm:$0xff]
        %v1080 = vld [vmem:[#allocation2 + $0xe0] sm:$0xff]
        %v1081 = vld [vmem:[#allocation2 + $0xe8] sm:$0xff]
        %v1082 = vld [vmem:[#allocation2 + $0xf0] sm:$0xff]
        %v1083 = vld [vmem:[#allocation2 + $0xf8] sm:$0xff]
        %v1084 = vld [vmem:[#allocation2 + $0x100] sm:$0xff]
        %v1085 = vld [vmem:[#allocation2 + $0x108] sm:$0xff]
        %v1086 = vld [vmem:[#allocation2 + $0x110] sm:$0xff]
        %v1087 = vld [vmem:[#allocation2 + $0x118] sm:$0xff]
        %v1088 = vld [vmem:[#allocation2 + $0x120] sm:$0xff]
        %v1089 = vld [vmem:[#allocation2 + $0x128] sm:$0xff]
        %v1090 = vld [vmem:[#allocation2 + $0x130] sm:$0xff]
        %v1091 = vld [vmem:[#allocation2 + $0x138] sm:$0xff]
        %v1092 = vld [vmem:[#allocation2 + $0x140] sm:$0xff]
        %v1093 = vld [vmem:[#allocation2 + $0x148] sm:$0xff]
        %v1094 = vld [vmem:[#allocation2 + $0x150] sm:$0xff]
        %v1095 = vld [vmem:[#allocation2 + $0x158] sm:$0xff]
        %v1096 = vld [vmem:[#allocation2 + $0x160] sm:$0xff]
        %v1097 = vld [vmem:[#allocation2 + $0x168] sm:$0xff]
        %v1098 = vld [vmem:[#allocation2 + $0x170] sm:$0xff]
        %v1099 = vld [vmem:[#allocation2 + $0x178] sm:$0xff]
        %v1100 = vld [vmem:[#allocation2 + $0x180] sm:$0xff]
        %v1101 = vld [vmem:[#allocation2 + $0x188] sm:$0xff]
        %v1102 = vld [vmem:[#allocation2 + $0x190] sm:$0xff]
        %v1103 = vld [vmem:[#allocation2 + $0x198] sm:$0xff]
        %v1104 = vld [vmem:[#allocation2 + $0x1a0] sm:$0xff]
        %v1105 = vld [vmem:[#allocation2 + $0x1a8] sm:$0xff]
        %v1106 = vld [vmem:[#allocation2 + $0x1b0] sm:$0xff]
        %v1107 = vld [vmem:[#allocation2 + $0x1b8] sm:$0xff]
        %v1108 = vld [vmem:[#allocation2 + $0x1c0] sm:$0xff]
        %v1109 = vld [vmem:[#allocation2 + $0x1c8] sm:$0xff]
        %v1110 = vld [vmem:[#allocation2 + $0x1d0] sm:$0xff]
        %v1111 = vld [vmem:[#allocation2 + $0x1d8] sm:$0xff]
        %v1112 = vld [vmem:[#allocation2 + $0x1e0] sm:$0xff]
        %v1113 = vld [vmem:[#allocation2 + $0x1e8] sm:$0xff]
        %v1114 = vld [vmem:[#allocation2 + $0x1f0] sm:$0xff]
        %v1115 = vld [vmem:[#allocation2 + $0x1f8] sm:$0xff]
        %v1116 = vld [vmem:[#allocation2 + $0x200] sm:$0xff]
        %v1117 = vld [vmem:[#allocation2 + $0x208] sm:$0xff]
        %v1118 = vld [vmem:[#allocation2 + $0x210] sm:$0xff]
        %v1119 = vld [vmem:[#allocation2 + $0x218] sm:$0xff]
        %v1120 = vld [vmem:[#allocation2 + $0x220] sm:$0xff]
        %v1121 = vld [vmem:[#allocation2 + $0x228] sm:$0xff]
        %v1122 = vld [vmem:[#allocation2 + $0x230] sm:$0xff]
        %v1123 = vld [vmem:[#allocation2 + $0x238] sm:$0xff]
        %v1124 = vld [vmem:[#allocation2 + $0x240] sm:$0xff]
        %v1125 = vld [vmem:[#allocation2 + $0x248] sm:$0xff]
        %v1126 = vld [vmem:[#allocation2 + $0x250] sm:$0xff]
        %v1127 = vld [vmem:[#allocation2 + $0x258] sm:$0xff]
        %v1128 = vld [vmem:[#allocation2 + $0x260] sm:$0xff]
        %v1129 = vld [vmem:[#allocation2 + $0x268] sm:$0xff]
        %v1130 = vld [vmem:[#allocation2 + $0x270] sm:$0xff]
        %v1131 = vld [vmem:[#allocation2 + $0x278] sm:$0xff]
        %v1132 = vld [vmem:[#allocation2 + $0x280] sm:$0xff]
        %v1133 = vld [vmem:[#allocation2 + $0x288] sm:$0xff]
        %v1134 = vld [vmem:[#allocation2 + $0x290] sm:$0xff]
        %v1135 = vld [vmem:[#allocation2 + $0x298] sm:$0xff]
        %v1136 = vld [vmem:[#allocation2 + $0x2a0] sm:$0xff]
        %v1137 = vld [vmem:[#allocation2 + $0x2a8] sm:$0xff]
        %v1138 = vld [vmem:[#allocation2 + $0x2b0] sm:$0xff]
        %v1139 = vld [vmem:[#allocation2 + $0x2b8] sm:$0xff]
        %v1140 = vld [vmem:[#allocation2 + $0x2c0] sm:$0xff]
        %v1141 = vld [vmem:[#allocation2 + $0x2c8] sm:$0xff]
        %v1142 = vld [vmem:[#allocation2 + $0x2d0] sm:$0xff]
        %v1143 = vld [vmem:[#allocation2 + $0x2d8] sm:$0xff]
        %v1144 = vld [vmem:[#allocation2 + $0x2e0] sm:$0xff]
        %v1145 = vld [vmem:[#allocation2 + $0x2e8] sm:$0xff]
        %v1146 = vld [vmem:[#allocation2 + $0x2f0] sm:$0xff]
        %v1147 = vld [vmem:[#allocation2 + $0x2f8] sm:$0xff]
        %v1148 = vld [vmem:[#allocation2 + $0x300] sm:$0xff]
        %v1149 = vld [vmem:[#allocation2 + $0x308] sm:$0xff]
        %v1150 = vld [vmem:[#allocation2 + $0x310] sm:$0xff]
        %v1151 = vld [vmem:[#allocation2 + $0x318] sm:$0xff]
        %v1152 = vld [vmem:[#allocation2 + $0x320] sm:$0xff]
        %v1153 = vld [vmem:[#allocation2 + $0x328] sm:$0xff]
        %v1154 = vld [vmem:[#allocation2 + $0x330] sm:$0xff]
        %v1155 = vld [vmem:[#allocation2 + $0x338] sm:$0xff]
        %v1156 = vld [vmem:[#allocation2 + $0x340] sm:$0xff]
        %v1157 = vld [vmem:[#allocation2 + $0x348] sm:$0xff]
        %v1158 = vld [vmem:[#allocation2 + $0x350] sm:$0xff]
        %v1159 = vld [vmem:[#allocation2 + $0x358] sm:$0xff]
        %v1160 = vld [vmem:[#allocation2 + $0x360] sm:$0xff]
        %v1161 = vld [vmem:[#allocation2 + $0x368] sm:$0xff]
        %v1162 = vld [vmem:[#allocation2 + $0x370] sm:$0xff]
        %v1163 = vld [vmem:[#allocation2 + $0x378] sm:$0xff]
        %v1164 = vld [vmem:[#allocation2 + $0x380] sm:$0xff]
        %v1165 = vld [vmem:[#allocation2 + $0x388] sm:$0xff]
        %v1166 = vld [vmem:[#allocation2 + $0x390] sm:$0xff]
        %v1167 = vld [vmem:[#allocation2 + $0x398] sm:$0xff]
        %v1168 = vld [vmem:[#allocation2 + $0x3a0] sm:$0xff]
        %v1169 = vld [vmem:[#allocation2 + $0x3a8] sm:$0xff]
        %v1170 = vld [vmem:[#allocation2 + $0x3b0] sm:$0xff]
        %v1171 = vld [vmem:[#allocation2 + $0x3b8] sm:$0xff]
        %v1172 = vld [vmem:[#allocation2 + $0x3c0] sm:$0xff]
        %v1173 = vld [vmem:[#allocation2 + $0x3c8] sm:$0xff]
        %v1174 = vld [vmem:[#allocation2 + $0x3d0] sm:$0xff]
        %v1175 = vld [vmem:[#allocation2 + $0x3d8] sm:$0xff]
        %v1176 = vld [vmem:[#allocation2 + $0x3e0] sm:$0xff]
        %v1177 = vld [vmem:[#allocation2 + $0x3e8] sm:$0xff]
        %v1178 = vld [vmem:[#allocation2 + $0x3f0] sm:$0xff]
        %v1179 = vld [vmem:[#allocation2 + $0x3f8] sm:$0xff]
        %v1180 = vld [vmem:[%s263] sm:$0xff]
        %vm1181 = vcmask 64512
        %v1183 = vsel %vm1181, %v1052, 0
        %v1186 = vsel %vm1181, %v1053, 0
        %v1189 = vsel %vm1181, %v1054, 0
        %v1192 = vsel %vm1181, %v1055, 0
        %v1195 = vsel %vm1181, %v1056, 0
        %v1198 = vsel %vm1181, %v1057, 0
        %v1201 = vsel %vm1181, %v1058, 0
        %v1204 = vsel %vm1181, %v1059, 0
        %v1207 = vsel %vm1181, %v1060, 0
        %v1210 = vsel %vm1181, %v1061, 0
        %v1213 = vsel %vm1181, %v1062, 0
        %v1216 = vsel %vm1181, %v1063, 0
        %v1219 = vsel %vm1181, %v1064, 0
        %v1222 = vsel %vm1181, %v1065, 0
        %v1225 = vsel %vm1181, %v1066, 0
        %v1228 = vsel %vm1181, %v1067, 0
        %v1231 = vsel %vm1181, %v1068, 0
        %v1234 = vsel %vm1181, %v1069, 0
        %v1237 = vsel %vm1181, %v1070, 0
        %v1240 = vsel %vm1181, %v1071, 0
        %v1243 = vsel %vm1181, %v1072, 0
        %v1246 = vsel %vm1181, %v1073, 0
        %v1249 = vsel %vm1181, %v1074, 0
        %v1252 = vsel %vm1181, %v1075, 0
        %v1255 = vsel %vm1181, %v1076, 0
        %v1258 = vsel %vm1181, %v1077, 0
        %v1261 = vsel %vm1181, %v1078, 0
        %v1264 = vsel %vm1181, %v1079, 0
        %v1267 = vsel %vm1181, %v1080, 0
        %v1270 = vsel %vm1181, %v1081, 0
        %v1273 = vsel %vm1181, %v1082, 0
        %v1276 = vsel %vm1181, %v1083, 0
        %v1279 = vsel %vm1181, %v1084, 0
        %v1282 = vsel %vm1181, %v1085, 0
        %v1285 = vsel %vm1181, %v1086, 0
        %v1288 = vsel %vm1181, %v1087, 0
        %v1291 = vsel %vm1181, %v1088, 0
        %v1294 = vsel %vm1181, %v1089, 0
        %v1297 = vsel %vm1181, %v1090, 0
        %v1300 = vsel %vm1181, %v1091, 0
        %v1303 = vsel %vm1181, %v1092, 0
        %v1306 = vsel %vm1181, %v1093, 0
        %v1309 = vsel %vm1181, %v1094, 0
        %v1312 = vsel %vm1181, %v1095, 0
        %v1315 = vsel %vm1181, %v1096, 0
        %v1318 = vsel %vm1181, %v1097, 0
        %v1321 = vsel %vm1181, %v1098, 0
        %v1324 = vsel %vm1181, %v1099, 0
        %v1327 = vsel %vm1181, %v1100, 0
        %v1330 = vsel %vm1181, %v1101, 0
        %v1333 = vsel %vm1181, %v1102, 0
        %v1336 = vsel %vm1181, %v1103, 0
        %v1339 = vsel %vm1181, %v1104, 0
        %v1342 = vsel %vm1181, %v1105, 0
        %v1345 = vsel %vm1181, %v1106, 0
        %v1348 = vsel %vm1181, %v1107, 0
        %v1351 = vsel %vm1181, %v1108, 0
        %v1354 = vsel %vm1181, %v1109, 0
        %v1357 = vsel %vm1181, %v1110, 0
        %v1360 = vsel %vm1181, %v1111, 0
        %v1363 = vsel %vm1181, %v1112, 0
        %v1366 = vsel %vm1181, %v1113, 0
        %v1369 = vsel %vm1181, %v1114, 0
        %v1372 = vsel %vm1181, %v1115, 0
        %v1375 = vsel %vm1181, %v1116, 0
        %v1378 = vsel %vm1181, %v1117, 0
        %v1381 = vsel %vm1181, %v1118, 0
        %v1384 = vsel %vm1181, %v1119, 0
        %v1387 = vsel %vm1181, %v1120, 0
        %v1390 = vsel %vm1181, %v1121, 0
        %v1393 = vsel %vm1181, %v1122, 0
        %v1396 = vsel %vm1181, %v1123, 0
        %v1399 = vsel %vm1181, %v1124, 0
        %v1402 = vsel %vm1181, %v1125, 0
        %v1405 = vsel %vm1181, %v1126, 0
        %v1408 = vsel %vm1181, %v1127, 0
        %v1411 = vsel %vm1181, %v1128, 0
        %v1414 = vsel %vm1181, %v1129, 0
        %v1417 = vsel %vm1181, %v1130, 0
        %v1420 = vsel %vm1181, %v1131, 0
        %v1423 = vsel %vm1181, %v1132, 0
        %v1426 = vsel %vm1181, %v1133, 0
        %v1429 = vsel %vm1181, %v1134, 0
        %v1432 = vsel %vm1181, %v1135, 0
        %v1435 = vsel %vm1181, %v1136, 0
        %v1438 = vsel %vm1181, %v1137, 0
        %v1441 = vsel %vm1181, %v1138, 0
        %v1444 = vsel %vm1181, %v1139, 0
        %v1447 = vsel %vm1181, %v1140, 0
        %v1450 = vsel %vm1181, %v1141, 0
        %v1453 = vsel %vm1181, %v1142, 0
        %v1456 = vsel %vm1181, %v1143, 0
        %v1459 = vsel %vm1181, %v1144, 0
        %v1462 = vsel %vm1181, %v1145, 0
        %v1465 = vsel %vm1181, %v1146, 0
        %v1468 = vsel %vm1181, %v1147, 0
        %v1471 = vsel %vm1181, %v1148, 0
        %v1474 = vsel %vm1181, %v1149, 0
        %v1477 = vsel %vm1181, %v1150, 0
        %v1480 = vsel %vm1181, %v1151, 0
        %v1483 = vsel %vm1181, %v1152, 0
        %v1486 = vsel %vm1181, %v1153, 0
        %v1489 = vsel %vm1181, %v1154, 0
        %v1492 = vsel %vm1181, %v1155, 0
        %v1495 = vsel %vm1181, %v1156, 0
        %v1498 = vsel %vm1181, %v1157, 0
        %v1501 = vsel %vm1181, %v1158, 0
        %v1504 = vsel %vm1181, %v1159, 0
        %v1507 = vsel %vm1181, %v1160, 0
        %v1510 = vsel %vm1181, %v1161, 0
        %v1513 = vsel %vm1181, %v1162, 0
        %v1516 = vsel %vm1181, %v1163, 0
        %v1519 = vsel %vm1181, %v1164, 0
        %v1522 = vsel %vm1181, %v1165, 0
        %v1525 = vsel %vm1181, %v1166, 0
        %v1528 = vsel %vm1181, %v1167, 0
        %v1531 = vsel %vm1181, %v1168, 0
        %v1534 = vsel %vm1181, %v1169, 0
        %v1537 = vsel %vm1181, %v1170, 0
        %v1540 = vsel %vm1181, %v1171, 0
        %v1543 = vsel %vm1181, %v1172, 0
        %v1546 = vsel %vm1181, %v1173, 0
        %v1549 = vsel %vm1181, %v1174, 0
        %v1552 = vsel %vm1181, %v1175, 0
        %v1555 = vsel %vm1181, %v1176, 0
        %v1558 = vsel %vm1181, %v1177, 0
        %v1561 = vsel %vm1181, %v1178, 0
        %v1564 = vsel %vm1181, %v1179, 0
        %1566 = vmatpush.msra.mxu0 0.0
        %1567 = vmatpush.msra.mxu0 0.0
        %1568 = vmatpush.msra.mxu0 0.0
        %1569 = vmatpush.msra.mxu0 0.0
        %1570 = vmatpush.msra.mxu0 0.0
        %1571 = vmatpush.msra.mxu0 0.0
        %1572 = vmatpush.msra.mxu0 0.0
        %1573 = vmatpush.msra.mxu0 0.0
        %1574 = vmatpush.msra.mxu0 0.0
        %1575 = vmatpush.msra.mxu0 0.0
        %1576 = vmatpush.msra.mxu0 0.0
        %1577 = vmatpush.msra.mxu0 0.0
        %1578 = vmatpush.msra.mxu0 0.0
        %1579 = vmatpush.msra.mxu0 0.0
        %1580 = vmatpush.msra.mxu0 0.0
        %1581 = vmatpush.msra.mxu0 %v1180
        %1582 = vmatmul.f32.gmra.mxu0 %v1183
        %v1583 = vpop.f32.mrf.mxu0
        %v1584 = vadd.f32 0.0, %v1583
        %1585 = vmatmul.f32.gmra.mxu0 %v1186
        %v1586 = vpop.f32.mrf.mxu0
        %v1587 = vadd.f32 0.0, %v1586
        %1588 = vmatmul.f32.gmra.mxu0 %v1189
        %v1589 = vpop.f32.mrf.mxu0
        %v1590 = vadd.f32 0.0, %v1589
        %1591 = vmatmul.f32.gmra.mxu0 %v1192
        %v1592 = vpop.f32.mrf.mxu0
        %v1593 = vadd.f32 0.0, %v1592
        %1594 = vmatmul.f32.gmra.mxu0 %v1195
        %v1595 = vpop.f32.mrf.mxu0
        %v1596 = vadd.f32 0.0, %v1595
        %1597 = vmatmul.f32.gmra.mxu0 %v1198
        %v1598 = vpop.f32.mrf.mxu0
        %v1599 = vadd.f32 0.0, %v1598
        %1600 = vmatmul.f32.gmra.mxu0 %v1201
        %v1601 = vpop.f32.mrf.mxu0
        %v1602 = vadd.f32 0.0, %v1601
        %1603 = vmatmul.f32.gmra.mxu0 %v1204
        %v1604 = vpop.f32.mrf.mxu0
        %v1605 = vadd.f32 0.0, %v1604
        %1606 = vmatmul.f32.gmra.mxu0 %v1207
        %v1607 = vpop.f32.mrf.mxu0
        %v1608 = vadd.f32 0.0, %v1607
        %1609 = vmatmul.f32.gmra.mxu0 %v1210
        %v1610 = vpop.f32.mrf.mxu0
        %v1611 = vadd.f32 0.0, %v1610
        %1612 = vmatmul.f32.gmra.mxu0 %v1213
        %v1613 = vpop.f32.mrf.mxu0
        %v1614 = vadd.f32 0.0, %v1613
        %1615 = vmatmul.f32.gmra.mxu0 %v1216
        %v1616 = vpop.f32.mrf.mxu0
        %v1617 = vadd.f32 0.0, %v1616
        %1618 = vmatmul.f32.gmra.mxu0 %v1219
        %v1619 = vpop.f32.mrf.mxu0
        %v1620 = vadd.f32 0.0, %v1619
        %1621 = vmatmul.f32.gmra.mxu0 %v1222
        %v1622 = vpop.f32.mrf.mxu0
        %v1623 = vadd.f32 0.0, %v1622
        %1624 = vmatmul.f32.gmra.mxu0 %v1225
        %v1625 = vpop.f32.mrf.mxu0
        %v1626 = vadd.f32 0.0, %v1625
        %1627 = vmatmul.f32.gmra.mxu0 %v1228
        %v1628 = vpop.f32.mrf.mxu0
        %v1629 = vadd.f32 0.0, %v1628
        %1630 = vmatmul.f32.gmra.mxu0 %v1231
        %v1631 = vpop.f32.mrf.mxu0
        %v1632 = vadd.f32 0.0, %v1631
        %1633 = vmatmul.f32.gmra.mxu0 %v1234
        %v1634 = vpop.f32.mrf.mxu0
        %v1635 = vadd.f32 0.0, %v1634
        %1636 = vmatmul.f32.gmra.mxu0 %v1237
        %v1637 = vpop.f32.mrf.mxu0
        %v1638 = vadd.f32 0.0, %v1637
        %1639 = vmatmul.f32.gmra.mxu0 %v1240
        %v1640 = vpop.f32.mrf.mxu0
        %v1641 = vadd.f32 0.0, %v1640
        %1642 = vmatmul.f32.gmra.mxu0 %v1243
        %v1643 = vpop.f32.mrf.mxu0
        %v1644 = vadd.f32 0.0, %v1643
        %1645 = vmatmul.f32.gmra.mxu0 %v1246
        %v1646 = vpop.f32.mrf.mxu0
        %v1647 = vadd.f32 0.0, %v1646
        %1648 = vmatmul.f32.gmra.mxu0 %v1249
        %v1649 = vpop.f32.mrf.mxu0
        %v1650 = vadd.f32 0.0, %v1649
        %1651 = vmatmul.f32.gmra.mxu0 %v1252
        %v1652 = vpop.f32.mrf.mxu0
        %v1653 = vadd.f32 0.0, %v1652
        %1654 = vmatmul.f32.gmra.mxu0 %v1255
        %v1655 = vpop.f32.mrf.mxu0
        %v1656 = vadd.f32 0.0, %v1655
        %1657 = vmatmul.f32.gmra.mxu0 %v1258
        %v1658 = vpop.f32.mrf.mxu0
        %v1659 = vadd.f32 0.0, %v1658
        %1660 = vmatmul.f32.gmra.mxu0 %v1261
        %v1661 = vpop.f32.mrf.mxu0
        %v1662 = vadd.f32 0.0, %v1661
        %1663 = vmatmul.f32.gmra.mxu0 %v1264
        %v1664 = vpop.f32.mrf.mxu0
        %v1665 = vadd.f32 0.0, %v1664
        %1666 = vmatmul.f32.gmra.mxu0 %v1267
        %v1667 = vpop.f32.mrf.mxu0
        %v1668 = vadd.f32 0.0, %v1667
        %1669 = vmatmul.f32.gmra.mxu0 %v1270
        %v1670 = vpop.f32.mrf.mxu0
        %v1671 = vadd.f32 0.0, %v1670
        %1672 = vmatmul.f32.gmra.mxu0 %v1273
        %v1673 = vpop.f32.mrf.mxu0
        %v1674 = vadd.f32 0.0, %v1673
        %1675 = vmatmul.f32.gmra.mxu0 %v1276
        %v1676 = vpop.f32.mrf.mxu0
        %v1677 = vadd.f32 0.0, %v1676
        %1678 = vmatmul.f32.gmra.mxu0 %v1279
        %v1679 = vpop.f32.mrf.mxu0
        %v1680 = vadd.f32 0.0, %v1679
        %1681 = vmatmul.f32.gmra.mxu0 %v1282
        %v1682 = vpop.f32.mrf.mxu0
        %v1683 = vadd.f32 0.0, %v1682
        %1684 = vmatmul.f32.gmra.mxu0 %v1285
        %v1685 = vpop.f32.mrf.mxu0
        %v1686 = vadd.f32 0.0, %v1685
        %1687 = vmatmul.f32.gmra.mxu0 %v1288
        %v1688 = vpop.f32.mrf.mxu0
        %v1689 = vadd.f32 0.0, %v1688
        %1690 = vmatmul.f32.gmra.mxu0 %v1291
        %v1691 = vpop.f32.mrf.mxu0
        %v1692 = vadd.f32 0.0, %v1691
        %1693 = vmatmul.f32.gmra.mxu0 %v1294
        %v1694 = vpop.f32.mrf.mxu0
        %v1695 = vadd.f32 0.0, %v1694
        %1696 = vmatmul.f32.gmra.mxu0 %v1297
        %v1697 = vpop.f32.mrf.mxu0
        %v1698 = vadd.f32 0.0, %v1697
        %1699 = vmatmul.f32.gmra.mxu0 %v1300
        %v1700 = vpop.f32.mrf.mxu0
        %v1701 = vadd.f32 0.0, %v1700
        %1702 = vmatmul.f32.gmra.mxu0 %v1303
        %v1703 = vpop.f32.mrf.mxu0
        %v1704 = vadd.f32 0.0, %v1703
        %1705 = vmatmul.f32.gmra.mxu0 %v1306
        %v1706 = vpop.f32.mrf.mxu0
        %v1707 = vadd.f32 0.0, %v1706
        %1708 = vmatmul.f32.gmra.mxu0 %v1309
        %v1709 = vpop.f32.mrf.mxu0
        %v1710 = vadd.f32 0.0, %v1709
        %1711 = vmatmul.f32.gmra.mxu0 %v1312
        %v1712 = vpop.f32.mrf.mxu0
        %v1713 = vadd.f32 0.0, %v1712
        %1714 = vmatmul.f32.gmra.mxu0 %v1315
        %v1715 = vpop.f32.mrf.mxu0
        %v1716 = vadd.f32 0.0, %v1715
        %1717 = vmatmul.f32.gmra.mxu0 %v1318
        %v1718 = vpop.f32.mrf.mxu0
        %v1719 = vadd.f32 0.0, %v1718
        %1720 = vmatmul.f32.gmra.mxu0 %v1321
        %v1721 = vpop.f32.mrf.mxu0
        %v1722 = vadd.f32 0.0, %v1721
        %1723 = vmatmul.f32.gmra.mxu0 %v1324
        %v1724 = vpop.f32.mrf.mxu0
        %v1725 = vadd.f32 0.0, %v1724
        %1726 = vmatmul.f32.gmra.mxu0 %v1327
        %v1727 = vpop.f32.mrf.mxu0
        %v1728 = vadd.f32 0.0, %v1727
        %1729 = vmatmul.f32.gmra.mxu0 %v1330
        %v1730 = vpop.f32.mrf.mxu0
        %v1731 = vadd.f32 0.0, %v1730
        %1732 = vmatmul.f32.gmra.mxu0 %v1333
        %v1733 = vpop.f32.mrf.mxu0
        %v1734 = vadd.f32 0.0, %v1733
        %1735 = vmatmul.f32.gmra.mxu0 %v1336
        %v1736 = vpop.f32.mrf.mxu0
        %v1737 = vadd.f32 0.0, %v1736
        %1738 = vmatmul.f32.gmra.mxu0 %v1339
        %v1739 = vpop.f32.mrf.mxu0
        %v1740 = vadd.f32 0.0, %v1739
        %1741 = vmatmul.f32.gmra.mxu0 %v1342
        %v1742 = vpop.f32.mrf.mxu0
        %v1743 = vadd.f32 0.0, %v1742
        %1744 = vmatmul.f32.gmra.mxu0 %v1345
        %v1745 = vpop.f32.mrf.mxu0
        %v1746 = vadd.f32 0.0, %v1745
        %1747 = vmatmul.f32.gmra.mxu0 %v1348
        %v1748 = vpop.f32.mrf.mxu0
        %v1749 = vadd.f32 0.0, %v1748
        %1750 = vmatmul.f32.gmra.mxu0 %v1351
        %v1751 = vpop.f32.mrf.mxu0
        %v1752 = vadd.f32 0.0, %v1751
        %1753 = vmatmul.f32.gmra.mxu0 %v1354
        %v1754 = vpop.f32.mrf.mxu0
        %v1755 = vadd.f32 0.0, %v1754
        %1756 = vmatmul.f32.gmra.mxu0 %v1357
        %v1757 = vpop.f32.mrf.mxu0
        %v1758 = vadd.f32 0.0, %v1757
        %1759 = vmatmul.f32.gmra.mxu0 %v1360
        %v1760 = vpop.f32.mrf.mxu0
        %v1761 = vadd.f32 0.0, %v1760
        %1762 = vmatmul.f32.gmra.mxu0 %v1363
        %v1763 = vpop.f32.mrf.mxu0
        %v1764 = vadd.f32 0.0, %v1763
        %1765 = vmatmul.f32.gmra.mxu0 %v1366
        %v1766 = vpop.f32.mrf.mxu0
        %v1767 = vadd.f32 0.0, %v1766
        %1768 = vmatmul.f32.gmra.mxu0 %v1369
        %v1769 = vpop.f32.mrf.mxu0
        %v1770 = vadd.f32 0.0, %v1769
        %1771 = vmatmul.f32.gmra.mxu0 %v1372
        %v1772 = vpop.f32.mrf.mxu0
        %v1773 = vadd.f32 0.0, %v1772
        %1774 = vmatmul.f32.gmra.mxu0 %v1375
        %v1775 = vpop.f32.mrf.mxu0
        %v1776 = vadd.f32 0.0, %v1775
        %1777 = vmatmul.f32.gmra.mxu0 %v1378
        %v1778 = vpop.f32.mrf.mxu0
        %v1779 = vadd.f32 0.0, %v1778
        %1780 = vmatmul.f32.gmra.mxu0 %v1381
        %v1781 = vpop.f32.mrf.mxu0
        %v1782 = vadd.f32 0.0, %v1781
        %1783 = vmatmul.f32.gmra.mxu0 %v1384
        %v1784 = vpop.f32.mrf.mxu0
        %v1785 = vadd.f32 0.0, %v1784
        %1786 = vmatmul.f32.gmra.mxu0 %v1387
        %v1787 = vpop.f32.mrf.mxu0
        %v1788 = vadd.f32 0.0, %v1787
        %1789 = vmatmul.f32.gmra.mxu0 %v1390
        %v1790 = vpop.f32.mrf.mxu0
        %v1791 = vadd.f32 0.0, %v1790
        %1792 = vmatmul.f32.gmra.mxu0 %v1393
        %v1793 = vpop.f32.mrf.mxu0
        %v1794 = vadd.f32 0.0, %v1793
        %1795 = vmatmul.f32.gmra.mxu0 %v1396
        %v1796 = vpop.f32.mrf.mxu0
        %v1797 = vadd.f32 0.0, %v1796
        %1798 = vmatmul.f32.gmra.mxu0 %v1399
        %v1799 = vpop.f32.mrf.mxu0
        %v1800 = vadd.f32 0.0, %v1799
        %1801 = vmatmul.f32.gmra.mxu0 %v1402
        %v1802 = vpop.f32.mrf.mxu0
        %v1803 = vadd.f32 0.0, %v1802
        %1804 = vmatmul.f32.gmra.mxu0 %v1405
        %v1805 = vpop.f32.mrf.mxu0
        %v1806 = vadd.f32 0.0, %v1805
        %1807 = vmatmul.f32.gmra.mxu0 %v1408
        %v1808 = vpop.f32.mrf.mxu0
        %v1809 = vadd.f32 0.0, %v1808
        %1810 = vmatmul.f32.gmra.mxu0 %v1411
        %v1811 = vpop.f32.mrf.mxu0
        %v1812 = vadd.f32 0.0, %v1811
        %1813 = vmatmul.f32.gmra.mxu0 %v1414
        %v1814 = vpop.f32.mrf.mxu0
        %v1815 = vadd.f32 0.0, %v1814
        %1816 = vmatmul.f32.gmra.mxu0 %v1417
        %v1817 = vpop.f32.mrf.mxu0
        %v1818 = vadd.f32 0.0, %v1817
        %1819 = vmatmul.f32.gmra.mxu0 %v1420
        %v1820 = vpop.f32.mrf.mxu0
        %v1821 = vadd.f32 0.0, %v1820
        %1822 = vmatmul.f32.gmra.mxu0 %v1423
        %v1823 = vpop.f32.mrf.mxu0
        %v1824 = vadd.f32 0.0, %v1823
        %1825 = vmatmul.f32.gmra.mxu0 %v1426
        %v1826 = vpop.f32.mrf.mxu0
        %v1827 = vadd.f32 0.0, %v1826
        %1828 = vmatmul.f32.gmra.mxu0 %v1429
        %v1829 = vpop.f32.mrf.mxu0
        %v1830 = vadd.f32 0.0, %v1829
        %1831 = vmatmul.f32.gmra.mxu0 %v1432
        %v1832 = vpop.f32.mrf.mxu0
        %v1833 = vadd.f32 0.0, %v1832
        %1834 = vmatmul.f32.gmra.mxu0 %v1435
        %v1835 = vpop.f32.mrf.mxu0
        %v1836 = vadd.f32 0.0, %v1835
        %1837 = vmatmul.f32.gmra.mxu0 %v1438
        %v1838 = vpop.f32.mrf.mxu0
        %v1839 = vadd.f32 0.0, %v1838
        %1840 = vmatmul.f32.gmra.mxu0 %v1441
        %v1841 = vpop.f32.mrf.mxu0
        %v1842 = vadd.f32 0.0, %v1841
        %1843 = vmatmul.f32.gmra.mxu0 %v1444
        %v1844 = vpop.f32.mrf.mxu0
        %v1845 = vadd.f32 0.0, %v1844
        %1846 = vmatmul.f32.gmra.mxu0 %v1447
        %v1847 = vpop.f32.mrf.mxu0
        %v1848 = vadd.f32 0.0, %v1847
        %1849 = vmatmul.f32.gmra.mxu0 %v1450
        %v1850 = vpop.f32.mrf.mxu0
        %v1851 = vadd.f32 0.0, %v1850
        %1852 = vmatmul.f32.gmra.mxu0 %v1453
        %v1853 = vpop.f32.mrf.mxu0
        %v1854 = vadd.f32 0.0, %v1853
        %1855 = vmatmul.f32.gmra.mxu0 %v1456
        %v1856 = vpop.f32.mrf.mxu0
        %v1857 = vadd.f32 0.0, %v1856
        %1858 = vmatmul.f32.gmra.mxu0 %v1459
        %v1859 = vpop.f32.mrf.mxu0
        %v1860 = vadd.f32 0.0, %v1859
        %1861 = vmatmul.f32.gmra.mxu0 %v1462
        %v1862 = vpop.f32.mrf.mxu0
        %v1863 = vadd.f32 0.0, %v1862
        %1864 = vmatmul.f32.gmra.mxu0 %v1465
        %v1865 = vpop.f32.mrf.mxu0
        %v1866 = vadd.f32 0.0, %v1865
        %1867 = vmatmul.f32.gmra.mxu0 %v1468
        %v1868 = vpop.f32.mrf.mxu0
        %v1869 = vadd.f32 0.0, %v1868
        %1870 = vmatmul.f32.gmra.mxu0 %v1471
        %v1871 = vpop.f32.mrf.mxu0
        %v1872 = vadd.f32 0.0, %v1871
        %1873 = vmatmul.f32.gmra.mxu0 %v1474
        %v1874 = vpop.f32.mrf.mxu0
        %v1875 = vadd.f32 0.0, %v1874
        %1876 = vmatmul.f32.gmra.mxu0 %v1477
        %v1877 = vpop.f32.mrf.mxu0
        %v1878 = vadd.f32 0.0, %v1877
        %1879 = vmatmul.f32.gmra.mxu0 %v1480
        %v1880 = vpop.f32.mrf.mxu0
        %v1881 = vadd.f32 0.0, %v1880
        %1882 = vmatmul.f32.gmra.mxu0 %v1483
        %v1883 = vpop.f32.mrf.mxu0
        %v1884 = vadd.f32 0.0, %v1883
        %1885 = vmatmul.f32.gmra.mxu0 %v1486
        %v1886 = vpop.f32.mrf.mxu0
        %v1887 = vadd.f32 0.0, %v1886
        %1888 = vmatmul.f32.gmra.mxu0 %v1489
        %v1889 = vpop.f32.mrf.mxu0
        %v1890 = vadd.f32 0.0, %v1889
        %1891 = vmatmul.f32.gmra.mxu0 %v1492
        %v1892 = vpop.f32.mrf.mxu0
        %v1893 = vadd.f32 0.0, %v1892
        %1894 = vmatmul.f32.gmra.mxu0 %v1495
        %v1895 = vpop.f32.mrf.mxu0
        %v1896 = vadd.f32 0.0, %v1895
        %1897 = vmatmul.f32.gmra.mxu0 %v1498
        %v1898 = vpop.f32.mrf.mxu0
        %v1899 = vadd.f32 0.0, %v1898
        %1900 = vmatmul.f32.gmra.mxu0 %v1501
        %v1901 = vpop.f32.mrf.mxu0
        %v1902 = vadd.f32 0.0, %v1901
        %1903 = vmatmul.f32.gmra.mxu0 %v1504
        %v1904 = vpop.f32.mrf.mxu0
        %v1905 = vadd.f32 0.0, %v1904
        %1906 = vmatmul.f32.gmra.mxu0 %v1507
        %v1907 = vpop.f32.mrf.mxu0
        %v1908 = vadd.f32 0.0, %v1907
        %1909 = vmatmul.f32.gmra.mxu0 %v1510
        %v1910 = vpop.f32.mrf.mxu0
        %v1911 = vadd.f32 0.0, %v1910
        %1912 = vmatmul.f32.gmra.mxu0 %v1513
        %v1913 = vpop.f32.mrf.mxu0
        %v1914 = vadd.f32 0.0, %v1913
        %1915 = vmatmul.f32.gmra.mxu0 %v1516
        %v1916 = vpop.f32.mrf.mxu0
        %v1917 = vadd.f32 0.0, %v1916
        %1918 = vmatmul.f32.gmra.mxu0 %v1519
        %v1919 = vpop.f32.mrf.mxu0
        %v1920 = vadd.f32 0.0, %v1919
        %1921 = vmatmul.f32.gmra.mxu0 %v1522
        %v1922 = vpop.f32.mrf.mxu0
        %v1923 = vadd.f32 0.0, %v1922
        %1924 = vmatmul.f32.gmra.mxu0 %v1525
        %v1925 = vpop.f32.mrf.mxu0
        %v1926 = vadd.f32 0.0, %v1925
        %1927 = vmatmul.f32.gmra.mxu0 %v1528
        %v1928 = vpop.f32.mrf.mxu0
        %v1929 = vadd.f32 0.0, %v1928
        %1930 = vmatmul.f32.gmra.mxu0 %v1531
        %v1931 = vpop.f32.mrf.mxu0
        %v1932 = vadd.f32 0.0, %v1931
        %1933 = vmatmul.f32.gmra.mxu0 %v1534
        %v1934 = vpop.f32.mrf.mxu0
        %v1935 = vadd.f32 0.0, %v1934
        %1936 = vmatmul.f32.gmra.mxu0 %v1537
        %v1937 = vpop.f32.mrf.mxu0
        %v1938 = vadd.f32 0.0, %v1937
        %1939 = vmatmul.f32.gmra.mxu0 %v1540
        %v1940 = vpop.f32.mrf.mxu0
        %v1941 = vadd.f32 0.0, %v1940
        %1942 = vmatmul.f32.gmra.mxu0 %v1543
        %v1943 = vpop.f32.mrf.mxu0
        %v1944 = vadd.f32 0.0, %v1943
        %1945 = vmatmul.f32.gmra.mxu0 %v1546
        %v1946 = vpop.f32.mrf.mxu0
        %v1947 = vadd.f32 0.0, %v1946
        %1948 = vmatmul.f32.gmra.mxu0 %v1549
        %v1949 = vpop.f32.mrf.mxu0
        %v1950 = vadd.f32 0.0, %v1949
        %1951 = vmatmul.f32.gmra.mxu0 %v1552
        %v1952 = vpop.f32.mrf.mxu0
        %v1953 = vadd.f32 0.0, %v1952
        %1954 = vmatmul.f32.gmra.mxu0 %v1555
        %v1955 = vpop.f32.mrf.mxu0
        %v1956 = vadd.f32 0.0, %v1955
        %1957 = vmatmul.f32.gmra.mxu0 %v1558
        %v1958 = vpop.f32.mrf.mxu0
        %v1959 = vadd.f32 0.0, %v1958
        %1960 = vmatmul.f32.gmra.mxu0 %v1561
        %v1961 = vpop.f32.mrf.mxu0
        %v1962 = vadd.f32 0.0, %v1961
        %1963 = vmatmul.f32.gmra.mxu0 %v1564
        %v1964 = vpop.f32.mrf.mxu0
        %v1965 = vadd.f32 0.0, %v1964
        %1966 = vdwg.mxu0
        %1967 = vst [vmem:[%s304] sm:$0xff] %v1584
        %1968 = vst [vmem:[%s304 + $0x8] sm:$0xff] %v1587
        %1969 = vst [vmem:[%s304 + $0x10] sm:$0xff] %v1590
        %1970 = vst [vmem:[%s304 + $0x18] sm:$0xff] %v1593
        %1971 = vst [vmem:[%s304 + $0x20] sm:$0xff] %v1596
        %1972 = vst [vmem:[%s304 + $0x28] sm:$0xff] %v1599
        %1973 = vst [vmem:[%s304 + $0x30] sm:$0xff] %v1602
        %1974 = vst [vmem:[%s304 + $0x38] sm:$0xff] %v1605
        %1975 = vst [vmem:[%s304 + $0x40] sm:$0xff] %v1608
        %1976 = vst [vmem:[%s304 + $0x48] sm:$0xff] %v1611
        %1977 = vst [vmem:[%s304 + $0x50] sm:$0xff] %v1614
        %1978 = vst [vmem:[%s304 + $0x58] sm:$0xff] %v1617
        %1979 = vst [vmem:[%s304 + $0x60] sm:$0xff] %v1620
        %1980 = vst [vmem:[%s304 + $0x68] sm:$0xff] %v1623
        %1981 = vst [vmem:[%s304 + $0x70] sm:$0xff] %v1626
        %1982 = vst [vmem:[%s304 + $0x78] sm:$0xff] %v1629
        %1983 = vst [vmem:[%s304 + $0x80] sm:$0xff] %v1632
        %1984 = vst [vmem:[%s304 + $0x88] sm:$0xff] %v1635
        %1985 = vst [vmem:[%s304 + $0x90] sm:$0xff] %v1638
        %1986 = vst [vmem:[%s304 + $0x98] sm:$0xff] %v1641
        %1987 = vst [vmem:[%s304 + $0xa0] sm:$0xff] %v1644
        %1988 = vst [vmem:[%s304 + $0xa8] sm:$0xff] %v1647
        %1989 = vst [vmem:[%s304 + $0xb0] sm:$0xff] %v1650
        %1990 = vst [vmem:[%s304 + $0xb8] sm:$0xff] %v1653
        %1991 = vst [vmem:[%s304 + $0xc0] sm:$0xff] %v1656
        %1992 = vst [vmem:[%s304 + $0xc8] sm:$0xff] %v1659
        %1993 = vst [vmem:[%s304 + $0xd0] sm:$0xff] %v1662
        %1994 = vst [vmem:[%s304 + $0xd8] sm:$0xff] %v1665
        %1995 = vst [vmem:[%s304 + $0xe0] sm:$0xff] %v1668
        %1996 = vst [vmem:[%s304 + $0xe8] sm:$0xff] %v1671
        %1997 = vst [vmem:[%s304 + $0xf0] sm:$0xff] %v1674
        %1998 = vst [vmem:[%s304 + $0xf8] sm:$0xff] %v1677
        %1999 = vst [vmem:[%s304 + $0x100] sm:$0xff] %v1680
        %2000 = vst [vmem:[%s304 + $0x108] sm:$0xff] %v1683
        %2001 = vst [vmem:[%s304 + $0x110] sm:$0xff] %v1686
        %2002 = vst [vmem:[%s304 + $0x118] sm:$0xff] %v1689
        %2003 = vst [vmem:[%s304 + $0x120] sm:$0xff] %v1692
        %2004 = vst [vmem:[%s304 + $0x128] sm:$0xff] %v1695
        %2005 = vst [vmem:[%s304 + $0x130] sm:$0xff] %v1698
        %2006 = vst [vmem:[%s304 + $0x138] sm:$0xff] %v1701
        %2007 = vst [vmem:[%s304 + $0x140] sm:$0xff] %v1704
        %2008 = vst [vmem:[%s304 + $0x148] sm:$0xff] %v1707
        %2009 = vst [vmem:[%s304 + $0x150] sm:$0xff] %v1710
        %2010 = vst [vmem:[%s304 + $0x158] sm:$0xff] %v1713
        %2011 = vst [vmem:[%s304 + $0x160] sm:$0xff] %v1716
        %2012 = vst [vmem:[%s304 + $0x168] sm:$0xff] %v1719
        %2013 = vst [vmem:[%s304 + $0x170] sm:$0xff] %v1722
        %2014 = vst [vmem:[%s304 + $0x178] sm:$0xff] %v1725
        %2015 = vst [vmem:[%s304 + $0x180] sm:$0xff] %v1728
        %2016 = vst [vmem:[%s304 + $0x188] sm:$0xff] %v1731
        %2017 = vst [vmem:[%s304 + $0x190] sm:$0xff] %v1734
        %2018 = vst [vmem:[%s304 + $0x198] sm:$0xff] %v1737
        %2019 = vst [vmem:[%s304 + $0x1a0] sm:$0xff] %v1740
        %2020 = vst [vmem:[%s304 + $0x1a8] sm:$0xff] %v1743
        %2021 = vst [vmem:[%s304 + $0x1b0] sm:$0xff] %v1746
        %2022 = vst [vmem:[%s304 + $0x1b8] sm:$0xff] %v1749
        %2023 = vst [vmem:[%s304 + $0x1c0] sm:$0xff] %v1752
        %2024 = vst [vmem:[%s304 + $0x1c8] sm:$0xff] %v1755
        %2025 = vst [vmem:[%s304 + $0x1d0] sm:$0xff] %v1758
        %2026 = vst [vmem:[%s304 + $0x1d8] sm:$0xff] %v1761
        %2027 = vst [vmem:[%s304 + $0x1e0] sm:$0xff] %v1764
        %2028 = vst [vmem:[%s304 + $0x1e8] sm:$0xff] %v1767
        %2029 = vst [vmem:[%s304 + $0x1f0] sm:$0xff] %v1770
        %2030 = vst [vmem:[%s304 + $0x1f8] sm:$0xff] %v1773
        %2031 = vst [vmem:[%s304 + $0x200] sm:$0xff] %v1776
        %2032 = vst [vmem:[%s304 + $0x208] sm:$0xff] %v1779
        %2033 = vst [vmem:[%s304 + $0x210] sm:$0xff] %v1782
        %2034 = vst [vmem:[%s304 + $0x218] sm:$0xff] %v1785
        %2035 = vst [vmem:[%s304 + $0x220] sm:$0xff] %v1788
        %2036 = vst [vmem:[%s304 + $0x228] sm:$0xff] %v1791
        %2037 = vst [vmem:[%s304 + $0x230] sm:$0xff] %v1794
        %2038 = vst [vmem:[%s304 + $0x238] sm:$0xff] %v1797
        %2039 = vst [vmem:[%s304 + $0x240] sm:$0xff] %v1800
        %2040 = vst [vmem:[%s304 + $0x248] sm:$0xff] %v1803
        %2041 = vst [vmem:[%s304 + $0x250] sm:$0xff] %v1806
        %2042 = vst [vmem:[%s304 + $0x258] sm:$0xff] %v1809
        %2043 = vst [vmem:[%s304 + $0x260] sm:$0xff] %v1812
        %2044 = vst [vmem:[%s304 + $0x268] sm:$0xff] %v1815
        %2045 = vst [vmem:[%s304 + $0x270] sm:$0xff] %v1818
        %2046 = vst [vmem:[%s304 + $0x278] sm:$0xff] %v1821
        %2047 = vst [vmem:[%s304 + $0x280] sm:$0xff] %v1824
        %2048 = vst [vmem:[%s304 + $0x288] sm:$0xff] %v1827
        %2049 = vst [vmem:[%s304 + $0x290] sm:$0xff] %v1830
        %2050 = vst [vmem:[%s304 + $0x298] sm:$0xff] %v1833
        %2051 = vst [vmem:[%s304 + $0x2a0] sm:$0xff] %v1836
        %2052 = vst [vmem:[%s304 + $0x2a8] sm:$0xff] %v1839
        %2053 = vst [vmem:[%s304 + $0x2b0] sm:$0xff] %v1842
        %2054 = vst [vmem:[%s304 + $0x2b8] sm:$0xff] %v1845
        %2055 = vst [vmem:[%s304 + $0x2c0] sm:$0xff] %v1848
        %2056 = vst [vmem:[%s304 + $0x2c8] sm:$0xff] %v1851
        %2057 = vst [vmem:[%s304 + $0x2d0] sm:$0xff] %v1854
        %2058 = vst [vmem:[%s304 + $0x2d8] sm:$0xff] %v1857
        %2059 = vst [vmem:[%s304 + $0x2e0] sm:$0xff] %v1860
        %2060 = vst [vmem:[%s304 + $0x2e8] sm:$0xff] %v1863
        %2061 = vst [vmem:[%s304 + $0x2f0] sm:$0xff] %v1866
        %2062 = vst [vmem:[%s304 + $0x2f8] sm:$0xff] %v1869
        %2063 = vst [vmem:[%s304 + $0x300] sm:$0xff] %v1872
        %2064 = vst [vmem:[%s304 + $0x308] sm:$0xff] %v1875
        %2065 = vst [vmem:[%s304 + $0x310] sm:$0xff] %v1878
        %2066 = vst [vmem:[%s304 + $0x318] sm:$0xff] %v1881
        %2067 = vst [vmem:[%s304 + $0x320] sm:$0xff] %v1884
        %2068 = vst [vmem:[%s304 + $0x328] sm:$0xff] %v1887
        %2069 = vst [vmem:[%s304 + $0x330] sm:$0xff] %v1890
        %2070 = vst [vmem:[%s304 + $0x338] sm:$0xff] %v1893
        %2071 = vst [vmem:[%s304 + $0x340] sm:$0xff] %v1896
        %2072 = vst [vmem:[%s304 + $0x348] sm:$0xff] %v1899
        %2073 = vst [vmem:[%s304 + $0x350] sm:$0xff] %v1902
        %2074 = vst [vmem:[%s304 + $0x358] sm:$0xff] %v1905
        %2075 = vst [vmem:[%s304 + $0x360] sm:$0xff] %v1908
        %2076 = vst [vmem:[%s304 + $0x368] sm:$0xff] %v1911
        %2077 = vst [vmem:[%s304 + $0x370] sm:$0xff] %v1914
        %2078 = vst [vmem:[%s304 + $0x378] sm:$0xff] %v1917
        %2079 = vst [vmem:[%s304 + $0x380] sm:$0xff] %v1920
        %2080 = vst [vmem:[%s304 + $0x388] sm:$0xff] %v1923
        %2081 = vst [vmem:[%s304 + $0x390] sm:$0xff] %v1926
        %2082 = vst [vmem:[%s304 + $0x398] sm:$0xff] %v1929
        %2083 = vst [vmem:[%s304 + $0x3a0] sm:$0xff] %v1932
        %2084 = vst [vmem:[%s304 + $0x3a8] sm:$0xff] %v1935
        %2085 = vst [vmem:[%s304 + $0x3b0] sm:$0xff] %v1938
        %2086 = vst [vmem:[%s304 + $0x3b8] sm:$0xff] %v1941
        %2087 = vst [vmem:[%s304 + $0x3c0] sm:$0xff] %v1944
        %2088 = vst [vmem:[%s304 + $0x3c8] sm:$0xff] %v1947
        %2089 = vst [vmem:[%s304 + $0x3d0] sm:$0xff] %v1950
        %2090 = vst [vmem:[%s304 + $0x3d8] sm:$0xff] %v1953
        %2091 = vst [vmem:[%s304 + $0x3e0] sm:$0xff] %v1956
        %2092 = vst [vmem:[%s304 + $0x3e8] sm:$0xff] %v1959
        %2093 = vst [vmem:[%s304 + $0x3f0] sm:$0xff] %v1962
        %2094 = vst [vmem:[%s304 + $0x3f8] sm:$0xff] %v1965
        %s2095 = sand.u32 %s149, 1
        %s2096 = scalar_lea.sflag [#allocation5], %s2095
        %s2097 = sand.u32 %s149, 1
        %s2098 = smul.addr %s2097, 1024
        %s2099 = scalar_lea.vmem [#allocation8], %s2098
        // Predicated region
        $region45: #{tpu_custom_call.1} parent=31 // pred_check
          %p2100 = pneg %p159
        $region46: #{tpu_custom_call.1} parent=31 // pred_check_branch
          %2102 = sbr.rel (%p2100) target = $region48
        $region47: #{tpu_custom_call.1} parent=31 // pred_region
          %s2103 = smul.u32 16, %s31
          %2105 = vsyncadd %s2096, 0
          %s2106 = sadd.s32 %s32, %s2103
          %s2107 = smul.addr %s30, 128
          %s2108 = sadd.s32 %s2106, %s2107
          %s2109 = smul.addr %s29, 512
          %s2110 = sadd.s32 %s2108, %s2109
          %s2111 = smul.addr %s2110, 8
          %s2112 = scalar_lea.hbm %s3, %s2111
          %s2113 = sshll.u32 %s2099, 4
          %s2114 = int_to_ptr.vmem [resolvable:$true] %s2113
          %s2115 = sshll.u32 %s2112, 4
          %s2116 = int_to_ptr.hbm [resolvable:$true] %s2115
          %2121 = dma.vmem_to_hbm [thread:$0]  %s2114, 16384, %s2116, %s2096, 128, 128, 8
        $region48: #{tpu_custom_call.1} parent=31 // pred_fallthru
          _
      $region32: #{tpu_custom_call.1} parent=5 // pred_fallthru
        _
      %p2122 = scmp.le.s32.totalorder 2, %s18
      // Predicated region
      $region49: #{tpu_custom_call.1} parent=5 // pred_check
        %p2123 = pneg %p2122
      $region50: #{tpu_custom_call.1} parent=5 // pred_check_branch
        %2125 = sbr.rel (%p2123) target = $region52
      $region51: #{tpu_custom_call.1} parent=5 // pred_region
        %s2126 = ssub.s32 %s18, 2
        // Predicated region
        $region53: #{tpu_custom_call.1} parent=51 // pred_check
          %p2127 = pneg %p165
        $region54: #{tpu_custom_call.1} parent=51 // pred_check_branch
          %2129 = sbr.rel (%p2127) target = $region56
        $region55: #{tpu_custom_call.1} parent=51 // pred_region
          %s2130 = sand.u32 %s150, 1
          %s2131 = scalar_lea.sflag [#allocation5], %s2130
          %s2132 = sand.u32 %s150, 1
          %s2133 = smul.addr %s2132, 1024
          %s2134 = scalar_lea.vmem [#allocation8], %s2133
          %2136 = dma.done %s2131, 16384
        $region56: #{tpu_custom_call.1} parent=51 // pred_fallthru
          _
      $region52: #{tpu_custom_call.1} parent=5 // pred_fallthru
        _
    $region6: #{tpu_custom_call.1} parent=1 // loop_footer
      %s22 = sadd.s32 1, %s18
    $region7: #{tpu_custom_call.1} parent=1 // loop_footer_branch
      %17 = sbr.rel target = $region3
    $region8: #{tpu_custom_call.1} parent=1 // loop_exit
      _
    %2137 = vsyncpa [#allocation4], 1
    %s2138 = scalar_lea.sflag [#allocation4], 1
    %2139 = vsyncpa %s2138, 1
    %2140 = vsyncpa [#allocation7], 1
    %s2141 = scalar_lea.sflag [#allocation7], 1
    %2142 = vsyncpa %s2141, 1
    %2143 = vsyncpa [#allocation5], 1
    %s2144 = scalar_lea.sflag [#allocation5], 1
    %2145 = vsyncpa %s2144, 1

</llo_original>
